<compile_context>
chip_gen: v6e
topology: v6e:2x2x1
jax: 0.10.0
libtpu: 0.0.40
codegen_flags: <defaults>
</compile_context>

<pallas_src>
import functools

import jax
import jax.numpy as jnp
import numpy as np
from jax.experimental import pallas as pl
from jax.experimental.pallas import tpu as pltpu

BN_EPS = 1e-5


def _round_up(a, b):
    return (a + b - 1) // b * b


# ---------------------------------------------------------------------------
# Pallas kernel: fused direct conv + folded-BN bias + ReLU
# ---------------------------------------------------------------------------
def _conv_bn_relu_kernel(x_ref, w_ref, b_ref, o_ref, *, k, th, w_out, c_in):
    """x_ref: (1,1,th+k-1,W+2p,C) bf16 halo'd activation tile
       w_ref: (k*k, C, Co_pad)    bf16 BN-folded weights (resident across grid)
       b_ref: (1, Co_pad)         f32 folded bias (resident across grid)
       o_ref: (1, th, w_out, Co_pad) f32 output tile."""
    co_pad = o_ref.shape[-1]
    x = x_ref[0, 0]                                            # (th+k-1, W+2p, C)
    # Start the accumulator from the folded bias (hoisted broadcast, done once):
    # the epilogue is then a single ReLU pass.
    acc = jnp.broadcast_to(b_ref[...], (th * w_out, co_pad)).astype(jnp.float32)
    for kh in range(k):                                        # unrolled k*k taps
        for kw in range(k):
            patch = x[kh:kh + th, kw:kw + w_out, :].reshape(th * w_out, c_in)
            acc = acc + jnp.dot(patch, w_ref[kh * k + kw],
                                preferred_element_type=jnp.float32)
    y = jnp.maximum(acc, 0.0)                                  # f32 epilogue
    o_ref[...] = y.reshape(1, th, w_out, co_pad).astype(o_ref.dtype)


# ---------------------------------------------------------------------------
# Wrapper
# ---------------------------------------------------------------------------
def _pick_tile_h(h_out, w_in, w_out, c_in, co_pad, k, p, budget_bytes):
    """Largest output-row tile whose double-buffered blocks fit the VMEM budget."""
    def vmem_bytes(th):
        in_blk = (th + k - 1) * (w_in + 2 * p) * c_in * 2      # bf16, double-buffered
        out_blk = th * w_out * co_pad * 4                      # f32, double-buffered
        wts = k * k * c_in * co_pad * 2 + 4 * co_pad           # resident weights + bias
        acc = th * w_out * co_pad * 4                          # in-kernel accumulator
        return 2 * in_blk + 2 * out_blk + wts + acc

    th = h_out
    while th > 8 and vmem_bytes(th) > budget_bytes:
        th = (th + 1) // 2
    return max(1, th)


def conv2d_batchnorm_relu(x_nchw, params, *, stride=1, padding=None, dilation=1,
                          vmem_budget_bytes=12 * 1024 * 1024):
    """Fused Conv2d(k, stride=1, padding) + BatchNorm2d(eval) + ReLU. NCHW in / NCHW out."""
    assert stride == 1 and dilation == 1, "TODO(synk): only stride=1, dilation=1 supported"
    w = params["w"]                                            # (Co, Ci, k, k) OIHW
    co, ci, k, k2 = w.shape
    assert k == k2
    p = (k // 2) if padding is None else padding

    n, c, h, w_in = x_nchw.shape
    assert c == ci
    h_out = h + 2 * p - k + 1
    w_out = w_in + 2 * p - k + 1

    # Fold inference-mode BN (+ conv bias) into weights / bias; pad Co to 128 lanes.
    scale = params["gamma"] / jnp.sqrt(params["var"] + BN_EPS)
    bias = (params["b"] - params["mean"]) * scale + params["beta"]
    co_pad = _round_up(co, 128)
    # PyTorch OIHW -> (k*k, Ci, Co), BN scale folded, bf16, lane-padded.
    w_taps = jnp.transpose(w, (2, 3, 1, 0)).reshape(k * k, ci, co) * scale[None, None, :]
    w_taps = jnp.pad(w_taps, ((0, 0), (0, 0), (0, co_pad - co))).astype(jnp.bfloat16)
    b_row = jnp.pad(bias, (0, co_pad - co)).reshape(1, co_pad).astype(jnp.float32)

    x = jnp.transpose(x_nchw, (0, 2, 3, 1)).astype(jnp.bfloat16)   # NHWC, bf16 operands

    th = _pick_tile_h(h_out, w_in, w_out, ci, co_pad, k, p, vmem_budget_bytes)
    n_th = pl.cdiv(h_out, th)
    h_eff = n_th * th

    # Zero-pad (conv padding + extra bottom rows for the ragged last tile).
    bot = h_eff + k - 1 - p - h
    xp = jnp.pad(x, ((0, 0), (p, bot), (p, p), (0, 0)))

    if n_th == 1:
        # Single tile covers the whole image: no halo duplication, no extra HBM copy.
        x_halo = xp.reshape(n, 1, th + k - 1, w_in + 2 * p, ci)
    else:
        # Gather per-tile halo slabs: (N, n_th, th+k-1, W+2p, Ci).
        # Only k-1 rows per tile are duplicated.
        row_idx = (jnp.arange(n_th, dtype=jnp.int32)[:, None] * th
                   + jnp.arange(th + k - 1, dtype=jnp.int32)[None, :]).reshape(-1)
        x_halo = jnp.take(xp, row_idx, axis=1).reshape(
            n, n_th, th + k - 1, w_in + 2 * p, ci)

    flops = 2 * n * h_out * w_out * k * k * ci * co
    bytes_accessed = (x_halo.size * 2 + w_taps.size * 2 + b_row.size * 4
                      + n * h_eff * w_out * co_pad * 4)
    cost = pl.CostEstimate(flops=int(flops), transcendentals=0,
                           bytes_accessed=int(bytes_accessed))

    kernel = functools.partial(_conv_bn_relu_kernel, k=k, th=th, w_out=w_out, c_in=ci)
    out = pl.pallas_call(
        kernel,
        out_shape=jax.ShapeDtypeStruct((n, h_eff, w_out, co_pad), jnp.float32),
        grid_spec=pltpu.PrefetchScalarGridSpec(
            num_scalar_prefetch=0,
            grid=(n, n_th),
            in_specs=[
                pl.BlockSpec((1, 1, th + k - 1, w_in + 2 * p, ci),
                             lambda b, i: (b, i, 0, 0, 0)),
                pl.BlockSpec((k * k, ci, co_pad), lambda b, i: (0, 0, 0)),
                pl.BlockSpec((1, co_pad), lambda b, i: (0, 0)),
            ],
            out_specs=pl.BlockSpec((1, th, w_out, co_pad), lambda b, i: (b, i, 0, 0)),
        ),
        compiler_params=pltpu.CompilerParams(
            dimension_semantics=("parallel", "parallel"),
            vmem_limit_bytes=32 * 1024 * 1024,
        ),
        cost_estimate=cost,
    )(x_halo, w_taps, b_row)

    out = out[:, :h_out, :, :co]                     # drop row / lane padding
    return jnp.transpose(out, (0, 3, 1, 2))          # -> NCHW


# ---------------------------------------------------------------------------
# Pure-JAX reference (same math path: bf16 operands, f32 accumulation)
# ---------------------------------------------------------------------------
def reference_forward(x_nchw, params, *, padding=None):
    w = params["w"]
    co, ci, k, _ = w.shape
    p = (k // 2) if padding is None else padding
    scale = params["gamma"] / jnp.sqrt(params["var"] + BN_EPS)
    bias = (params["b"] - params["mean"]) * scale + params["beta"]
    w_hwio = (jnp.transpose(w, (2, 3, 1, 0)) * scale[None, None, None, :]).astype(jnp.bfloat16)
    x = jnp.transpose(x_nchw, (0, 2, 3, 1)).astype(jnp.bfloat16)
    y = jax.lax.conv_general_dilated(
        x, w_hwio, window_strides=(1, 1), padding=[(p, p), (p, p)],
        dimension_numbers=("NHWC", "HWIO", "NHWC"),
        preferred_element_type=jnp.float32)
    y = jnp.maximum(y + bias[None, None, None, :], 0.0)
    return jnp.transpose(y, (0, 3, 1, 2))


# ---------------------------------------------------------------------------
# Deterministic parameter init (mirrors conv2DBatchNormRelu.__init__ shapes)
# ---------------------------------------------------------------------------
def init_params(key, in_channels, out_channels, kernel_size=3):
    kw_, kb, kg, kbt, km, kv = jax.random.split(key, 6)
    return dict(
        w=0.1 * jax.random.normal(
            kw_, (out_channels, in_channels, kernel_size, kernel_size), jnp.float32),
        b=0.1 * jax.random.normal(kb, (out_channels,), jnp.float32),
        gamma=1.0 + 0.1 * jax.random.normal(kg, (out_channels,), jnp.float32),
        beta=0.1 * jax.random.normal(kbt, (out_channels,), jnp.float32),
        mean=0.1 * jax.random.normal(km, (out_channels,), jnp.float32),
        var=1.0 + 0.1 * jnp.abs(jax.random.normal(kv, (out_channels,), jnp.float32)),
    )


if __name__ == "__main__":
    key = jax.random.PRNGKey(0)
    N, C_in, C_out, H, W = 2, 4, 8, 16, 16

    kx, kp = jax.random.split(key)
    x = jax.random.normal(kx, (N, C_in, H, W), jnp.float32)
    params = init_params(kp, C_in, C_out, kernel_size=3)

    fwd = jax.jit(functools.partial(conv2d_batchnorm_relu, stride=1, padding=1))
    out = jax.block_until_ready(fwd(x, params))
    ref = jax.block_until_ready(reference_forward(x, params, padding=1))

    assert out.shape == (N, C_out, H, W), out.shape
    np.testing.assert_allclose(np.asarray(out), np.asarray(ref), rtol=1e-2, atol=1e-2)

    print("KERNEL_OK")
</pallas_src>

<mosaic_0001>
module attributes {stable_mosaic.version = 11 : i64} {
  func.func @_conv_bn_relu_kernel(%arg0: i32, %arg1: i32, %arg2: memref<1x1x18x18x4xbf16, #tpu.memory_space<vmem>>, %arg3: memref<9x4x128xbf16, #tpu.memory_space<vmem>>, %arg4: memref<1x128xf32, #tpu.memory_space<vmem>>, %arg5: memref<1x16x16x128xf32, #tpu.memory_space<vmem>>) attributes {dimension_semantics = [#tpu.dimension_semantics<parallel>, #tpu.dimension_semantics<parallel>], iteration_bounds = array<i64: 2, 1>, scalar_prefetch = 0 : i64, scratch_operands = 0 : i64, tpu.core_type = #tpu.core_type<tc>, window_params = [{transform_indices = @transform_0, window_bounds = array<i64: 1, 1, 18, 18, 4>}, {pipeline_mode = #tpu.pipeline_mode<synchronous>, transform_indices = @transform_1, window_bounds = array<i64: 9, 4, 128>}, {pipeline_mode = #tpu.pipeline_mode<synchronous>, transform_indices = @transform_2, window_bounds = array<i64: 1, 128>}, {transform_indices = @transform_3, window_bounds = array<i64: 1, 16, 16, 128>}]} {
    %c0 = arith.constant 0 : index
    %c0_0 = arith.constant 0 : index
    %c0_1 = arith.constant 0 : index
    %c0_2 = arith.constant 0 : index
    %c0_3 = arith.constant 0 : index
    %0 = vector.load %arg2[%c0, %c0_0, %c0_1, %c0_2, %c0_3] : memref<1x1x18x18x4xbf16, #tpu.memory_space<vmem>>, vector<1x1x18x18x4xbf16>
    %1 = vector.shape_cast %0 : vector<1x1x18x18x4xbf16> to vector<18x18x4xbf16>
    %c0_4 = arith.constant 0 : index
    %c0_5 = arith.constant 0 : index
    %2 = vector.load %arg4[%c0_4, %c0_5] : memref<1x128xf32, #tpu.memory_space<vmem>>, vector<1x128xf32>
    %3 = vector.shape_cast %2 : vector<1x128xf32> to vector<1x128xf32>
    %4 = vector.broadcast %3 : vector<1x128xf32> to vector<256x128xf32>
    %5 = vector.extract_strided_slice %1 {offsets = [0, 0, 0], sizes = [16, 16, 4], strides = [1, 1, 1]} : vector<18x18x4xbf16> to vector<16x16x4xbf16>
    %6 = vector.shape_cast %5 : vector<16x16x4xbf16> to vector<256x4xbf16>
    %c0_6 = arith.constant 0 : index
    %c0_7 = arith.constant 0 : index
    %c0_8 = arith.constant 0 : index
    %7 = vector.load %arg3[%c0_6, %c0_7, %c0_8] : memref<9x4x128xbf16, #tpu.memory_space<vmem>>, vector<1x4x128xbf16>
    %8 = vector.shape_cast %7 : vector<1x4x128xbf16> to vector<4x128xbf16>
    %cst = arith.constant dense<0.000000e+00> : vector<256x128xf32>
    %9 = tpu.matmul %6, %8, %cst {dimension_numbers = #tpu.dot_dimension_numbers<[1], [0], [0], [1], [0, 0, 1, 1], [], []>} : vector<256x4xbf16>, vector<4x128xbf16>, vector<256x128xf32> -> vector<256x128xf32>
    %10 = arith.addf %4, %9 : vector<256x128xf32>
    %11 = vector.extract_strided_slice %1 {offsets = [0, 1, 0], sizes = [16, 16, 4], strides = [1, 1, 1]} : vector<18x18x4xbf16> to vector<16x16x4xbf16>
    %12 = vector.shape_cast %11 : vector<16x16x4xbf16> to vector<256x4xbf16>
    %c1 = arith.constant 1 : index
    %c0_9 = arith.constant 0 : index
    %c0_10 = arith.constant 0 : index
    %13 = vector.load %arg3[%c1, %c0_9, %c0_10] : memref<9x4x128xbf16, #tpu.memory_space<vmem>>, vector<1x4x128xbf16>
    %14 = vector.shape_cast %13 : vector<1x4x128xbf16> to vector<4x128xbf16>
    %cst_11 = arith.constant dense<0.000000e+00> : vector<256x128xf32>
    %15 = tpu.matmul %12, %14, %cst_11 {dimension_numbers = #tpu.dot_dimension_numbers<[1], [0], [0], [1], [0, 0, 1, 1], [], []>} : vector<256x4xbf16>, vector<4x128xbf16>, vector<256x128xf32> -> vector<256x128xf32>
    %16 = arith.addf %10, %15 : vector<256x128xf32>
    %17 = vector.extract_strided_slice %1 {offsets = [0, 2, 0], sizes = [16, 16, 4], strides = [1, 1, 1]} : vector<18x18x4xbf16> to vector<16x16x4xbf16>
    %18 = vector.shape_cast %17 : vector<16x16x4xbf16> to vector<256x4xbf16>
    %c2 = arith.constant 2 : index
    %c0_12 = arith.constant 0 : index
    %c0_13 = arith.constant 0 : index
    %19 = vector.load %arg3[%c2, %c0_12, %c0_13] : memref<9x4x128xbf16, #tpu.memory_space<vmem>>, vector<1x4x128xbf16>
    %20 = vector.shape_cast %19 : vector<1x4x128xbf16> to vector<4x128xbf16>
    %cst_14 = arith.constant dense<0.000000e+00> : vector<256x128xf32>
    %21 = tpu.matmul %18, %20, %cst_14 {dimension_numbers = #tpu.dot_dimension_numbers<[1], [0], [0], [1], [0, 0, 1, 1], [], []>} : vector<256x4xbf16>, vector<4x128xbf16>, vector<256x128xf32> -> vector<256x128xf32>
    %22 = arith.addf %16, %21 : vector<256x128xf32>
    %23 = vector.extract_strided_slice %1 {offsets = [1, 0, 0], sizes = [16, 16, 4], strides = [1, 1, 1]} : vector<18x18x4xbf16> to vector<16x16x4xbf16>
    %24 = vector.shape_cast %23 : vector<16x16x4xbf16> to vector<256x4xbf16>
    %c3 = arith.constant 3 : index
    %c0_15 = arith.constant 0 : index
    %c0_16 = arith.constant 0 : index
    %25 = vector.load %arg3[%c3, %c0_15, %c0_16] : memref<9x4x128xbf16, #tpu.memory_space<vmem>>, vector<1x4x128xbf16>
    %26 = vector.shape_cast %25 : vector<1x4x128xbf16> to vector<4x128xbf16>
    %cst_17 = arith.constant dense<0.000000e+00> : vector<256x128xf32>
    %27 = tpu.matmul %24, %26, %cst_17 {dimension_numbers = #tpu.dot_dimension_numbers<[1], [0], [0], [1], [0, 0, 1, 1], [], []>} : vector<256x4xbf16>, vector<4x128xbf16>, vector<256x128xf32> -> vector<256x128xf32>
    %28 = arith.addf %22, %27 : vector<256x128xf32>
    %29 = vector.extract_strided_slice %1 {offsets = [1, 1, 0], sizes = [16, 16, 4], strides = [1, 1, 1]} : vector<18x18x4xbf16> to vector<16x16x4xbf16>
    %30 = vector.shape_cast %29 : vector<16x16x4xbf16> to vector<256x4xbf16>
    %c4 = arith.constant 4 : index
    %c0_18 = arith.constant 0 : index
    %c0_19 = arith.constant 0 : index
    %31 = vector.load %arg3[%c4, %c0_18, %c0_19] : memref<9x4x128xbf16, #tpu.memory_space<vmem>>, vector<1x4x128xbf16>
    %32 = vector.shape_cast %31 : vector<1x4x128xbf16> to vector<4x128xbf16>
    %cst_20 = arith.constant dense<0.000000e+00> : vector<256x128xf32>
    %33 = tpu.matmul %30, %32, %cst_20 {dimension_numbers = #tpu.dot_dimension_numbers<[1], [0], [0], [1], [0, 0, 1, 1], [], []>} : vector<256x4xbf16>, vector<4x128xbf16>, vector<256x128xf32> -> vector<256x128xf32>
    %34 = arith.addf %28, %33 : vector<256x128xf32>
    %35 = vector.extract_strided_slice %1 {offsets = [1, 2, 0], sizes = [16, 16, 4], strides = [1, 1, 1]} : vector<18x18x4xbf16> to vector<16x16x4xbf16>
    %36 = vector.shape_cast %35 : vector<16x16x4xbf16> to vector<256x4xbf16>
    %c5 = arith.constant 5 : index
    %c0_21 = arith.constant 0 : index
    %c0_22 = arith.constant 0 : index
    %37 = vector.load %arg3[%c5, %c0_21, %c0_22] : memref<9x4x128xbf16, #tpu.memory_space<vmem>>, vector<1x4x128xbf16>
    %38 = vector.shape_cast %37 : vector<1x4x128xbf16> to vector<4x128xbf16>
    %cst_23 = arith.constant dense<0.000000e+00> : vector<256x128xf32>
    %39 = tpu.matmul %36, %38, %cst_23 {dimension_numbers = #tpu.dot_dimension_numbers<[1], [0], [0], [1], [0, 0, 1, 1], [], []>} : vector<256x4xbf16>, vector<4x128xbf16>, vector<256x128xf32> -> vector<256x128xf32>
    %40 = arith.addf %34, %39 : vector<256x128xf32>
    %41 = vector.extract_strided_slice %1 {offsets = [2, 0, 0], sizes = [16, 16, 4], strides = [1, 1, 1]} : vector<18x18x4xbf16> to vector<16x16x4xbf16>
    %42 = vector.shape_cast %41 : vector<16x16x4xbf16> to vector<256x4xbf16>
    %c6 = arith.constant 6 : index
    %c0_24 = arith.constant 0 : index
    %c0_25 = arith.constant 0 : index
    %43 = vector.load %arg3[%c6, %c0_24, %c0_25] : memref<9x4x128xbf16, #tpu.memory_space<vmem>>, vector<1x4x128xbf16>
    %44 = vector.shape_cast %43 : vector<1x4x128xbf16> to vector<4x128xbf16>
    %cst_26 = arith.constant dense<0.000000e+00> : vector<256x128xf32>
    %45 = tpu.matmul %42, %44, %cst_26 {dimension_numbers = #tpu.dot_dimension_numbers<[1], [0], [0], [1], [0, 0, 1, 1], [], []>} : vector<256x4xbf16>, vector<4x128xbf16>, vector<256x128xf32> -> vector<256x128xf32>
    %46 = arith.addf %40, %45 : vector<256x128xf32>
    %47 = vector.extract_strided_slice %1 {offsets = [2, 1, 0], sizes = [16, 16, 4], strides = [1, 1, 1]} : vector<18x18x4xbf16> to vector<16x16x4xbf16>
    %48 = vector.shape_cast %47 : vector<16x16x4xbf16> to vector<256x4xbf16>
    %c7 = arith.constant 7 : index
    %c0_27 = arith.constant 0 : index
    %c0_28 = arith.constant 0 : index
    %49 = vector.load %arg3[%c7, %c0_27, %c0_28] : memref<9x4x128xbf16, #tpu.memory_space<vmem>>, vector<1x4x128xbf16>
    %50 = vector.shape_cast %49 : vector<1x4x128xbf16> to vector<4x128xbf16>
    %cst_29 = arith.constant dense<0.000000e+00> : vector<256x128xf32>
    %51 = tpu.matmul %48, %50, %cst_29 {dimension_numbers = #tpu.dot_dimension_numbers<[1], [0], [0], [1], [0, 0, 1, 1], [], []>} : vector<256x4xbf16>, vector<4x128xbf16>, vector<256x128xf32> -> vector<256x128xf32>
    %52 = arith.addf %46, %51 : vector<256x128xf32>
    %53 = vector.extract_strided_slice %1 {offsets = [2, 2, 0], sizes = [16, 16, 4], strides = [1, 1, 1]} : vector<18x18x4xbf16> to vector<16x16x4xbf16>
    %54 = vector.shape_cast %53 : vector<16x16x4xbf16> to vector<256x4xbf16>
    %c8 = arith.constant 8 : index
    %c0_30 = arith.constant 0 : index
    %c0_31 = arith.constant 0 : index
    %55 = vector.load %arg3[%c8, %c0_30, %c0_31] : memref<9x4x128xbf16, #tpu.memory_space<vmem>>, vector<1x4x128xbf16>
    %56 = vector.shape_cast %55 : vector<1x4x128xbf16> to vector<4x128xbf16>
    %cst_32 = arith.constant dense<0.000000e+00> : vector<256x128xf32>
    %57 = tpu.matmul %54, %56, %cst_32 {dimension_numbers = #tpu.dot_dimension_numbers<[1], [0], [0], [1], [0, 0, 1, 1], [], []>} : vector<256x4xbf16>, vector<4x128xbf16>, vector<256x128xf32> -> vector<256x128xf32>
    %58 = arith.addf %52, %57 : vector<256x128xf32>
    %cst_33 = arith.constant 0.000000e+00 : f32
    %59 = vector.broadcast %cst_33 : f32 to vector<256x128xf32>
    %60 = arith.maximumf %58, %59 : vector<256x128xf32>
    %61 = vector.shape_cast %60 : vector<256x128xf32> to vector<1x16x16x128xf32>
    %c0_34 = arith.constant 0 : index
    %c0_35 = arith.constant 0 : index
    %c0_36 = arith.constant 0 : index
    %c0_37 = arith.constant 0 : index
    %62 = vector.load %arg5[%c0_34, %c0_35, %c0_36, %c0_37] : memref<1x16x16x128xf32, #tpu.memory_space<vmem>>, vector<1x16x16x128xf32>
    tpu.vector_store %arg5[%c0_34, %c0_35, %c0_36, %c0_37], %61 {strides = array<i32>} : memref<1x16x16x128xf32, #tpu.memory_space<vmem>>, vector<1x16x16x128xf32>,
    return
  }
  func.func @transform_0(%arg0: i32, %arg1: i32) -> (i32, i32, i32, i32, i32) {
    %c0_i32 = arith.constant 0 : i32
    %c0_i32_0 = arith.constant 0 : i32
    %c0_i32_1 = arith.constant 0 : i32
    %c0_i32_2 = arith.constant 0 : i32
    return %arg0, %arg1, %c0_i32, %c0_i32_0, %c0_i32_1 : i32, i32, i32, i32, i32
  }
  func.func @transform_1(%arg0: i32, %arg1: i32) -> (i32, i32, i32) {
    %c0_i32 = arith.constant 0 : i32
    %c0_i32_0 = arith.constant 0 : i32
    %c0_i32_1 = arith.constant 0 : i32
    %c0_i32_2 = arith.constant 0 : i32
    return %c0_i32, %c0_i32_0, %c0_i32_1 : i32, i32, i32
  }
  func.func @transform_2(%arg0: i32, %arg1: i32) -> (i32, i32) {
    %c0_i32 = arith.constant 0 : i32
    %c0_i32_0 = arith.constant 0 : i32
    %c0_i32_1 = arith.constant 0 : i32
    return %c0_i32, %c0_i32_0 : i32, i32
  }
  func.func @transform_3(%arg0: i32, %arg1: i32) -> (i32, i32, i32, i32) {
    %c0_i32 = arith.constant 0 : i32
    %c0_i32_0 = arith.constant 0 : i32
    %c0_i32_1 = arith.constant 0 : i32
    return %arg0, %arg1, %c0_i32, %c0_i32_0 : i32, i32, i32, i32
  }
}

</mosaic_0001>

<llo_original>
// kernel: conv2d_batchnorm_relu.1
$region0: #{conv2d_batchnorm_relu.1}
  #allocation0 [shape = 'u32[]', space=smem, size = 0x4, offset = 0x4, fixed_abs, tag = 'smem constant byte address 0x4 - core index']
  #allocation1 [shape = 'u32[144,128]{1,0:T(1,128)}', space=vmem, size = 0x12000, scoped, tag = 'internal scratch']
  %s0 = inlined_call_operand.vmem [shape: bf16[2,1,18,18,4], index: 0, kind: input, shape index: {}]
  %s1 = inlined_call_operand.vmem [shape: bf16[9,4,128], index: 1, kind: input, shape index: {}]
  %s2 = inlined_call_operand.vmem [shape: f32[1,128], index: 2, kind: input, shape index: {}]
  %s3 = inlined_call_operand.vmem [shape: f32[2,16,16,128], index: 3, kind: output, shape index: {}]
  %s4 = sld [smem:[#allocation0]]
  $region45: #{conv2d_batchnorm_relu.1} parent=0
    _
  %s6 = ssub.s32 1, %s4
  %s7 = scalar_select 0, %s6, %s4
  loop: start=0, step=1, limit=4
  $region2: #{conv2d_batchnorm_relu.1} parent=0 // loop_pre_header
    _
  $region3: #{conv2d_batchnorm_relu.1} parent=0 // loop_header
    %s9 = sphi 0, %s13
    %p10 = scmp.ge.s32.totalorder %s9, 4
    %s16 = sphi 0, %s28
    %s17 = sphi 0, %s24
    %s18 = sphi 0, %s16
    %s19 = sphi 0, %s17
    %s20 = sphi 0, %s18
    %s21 = sphi 0, %s19
    %s33 = sphi 0, %s35
    %s36 = sphi 0, %s33
    %s37 = sphi 0, %s36
    %s53 = sphi 0, %s37
    %s57 = sphi 0, %s57
    %s59 = sphi 0, %s57
    %s60 = sphi 0, %s59
    %s74 = sphi 0, %s60
    %s78 = sphi 0, %s78
    %s80 = sphi 0, %s78
    %s81 = sphi 0, %s80
    %s95 = sphi 0, %s81
    %s103 = sphi 0, %s105
    %s106 = sphi 0, %s103
    %s107 = sphi 0, %s106
    %s123 = sphi 0, %s107
  $region4: #{conv2d_batchnorm_relu.1} parent=0 // loop_header_branch
    %12 = sbr.rel (%p10) target = $region8
  $region5: #{conv2d_batchnorm_relu.1} parent=0 // loop_body
    %s14 = ssub.s32 %s9, 1
    %s15 = ssub.s32 %s9, 2
    %s22 = sadd.s32 1, %s17
    %p23 = scmp.ge.s32.totalorder %s22, 1
    %s24 = scalar_select %p23, 0, %s22
    %s25 = sadd.s32 1, %s16
    %s26 = scalar_select %p23, %s25, %s16
    %p27 = scmp.ge.s32.totalorder %s26, 2
    %s28 = scalar_select %p27, 0, %s26
    %s29 = ssub.s32 %s16, %s28
    %s30 = ssub.s32 %s17, %s24
    %s31 = sor.u32 %s29, %s30
    %p32 = scmp.eq.s32.totalorder %s31, 0
    %s34 = sadd.s32 %s33, 1
    %s35 = scalar_select %p32, %s33, %s34
    %p38 = pneg %p32
    %p39 = scmp.eq.s32.totalorder %s9, 1
    %p40 = por %p38, %p39
    %p41 = scmp.ne.s32.totalorder %s33, %s36
    %p42 = scmp.eq.s32.totalorder %s9, 0
    %p43 = por %p41, %p42
    %p44 = scmp.ne.s32.totalorder %s33, %s36
    %p45 = scmp.eq.s32.totalorder %s14, 1
    %p46 = por %p44, %p45
    %p47 = scmp.ne.s32.totalorder %s36, %s37
    %p48 = scmp.eq.s32.totalorder %s14, 0
    %p49 = por %p47, %p48
    %p50 = scmp.ne.s32.totalorder %s36, %s37
    %p51 = scmp.eq.s32.totalorder %s15, 1
    %p52 = por %p50, %p51
    %p54 = scmp.ne.s32.totalorder %s37, %s53
    %p55 = scmp.eq.s32.totalorder %s15, 0
    %p56 = por %p54, %p55
    %s58 = sadd.s32 %s57, 1
    %p61 = scmp.eq.s32.totalorder %s9, 1
    %p62 = scmp.ne.s32.totalorder %s57, %s59
    %p63 = scmp.eq.s32.totalorder %s9, 0
    %p64 = por %p62, %p63
    %p65 = scmp.ne.s32.totalorder %s57, %s59
    %p66 = scmp.eq.s32.totalorder %s14, 1
    %p67 = por %p65, %p66
    %p68 = scmp.ne.s32.totalorder %s59, %s60
    %p69 = scmp.eq.s32.totalorder %s14, 0
    %p70 = por %p68, %p69
    %p71 = scmp.ne.s32.totalorder %s59, %s60
    %p72 = scmp.eq.s32.totalorder %s15, 1
    %p73 = por %p71, %p72
    %p75 = scmp.ne.s32.totalorder %s60, %s74
    %p76 = scmp.eq.s32.totalorder %s15, 0
    %p77 = por %p75, %p76
    %s79 = sadd.s32 %s78, 1
    %p82 = scmp.eq.s32.totalorder %s9, 1
    %p83 = scmp.ne.s32.totalorder %s78, %s80
    %p84 = scmp.eq.s32.totalorder %s9, 0
    %p85 = por %p83, %p84
    %p86 = scmp.ne.s32.totalorder %s78, %s80
    %p87 = scmp.eq.s32.totalorder %s14, 1
    %p88 = por %p86, %p87
    %p89 = scmp.ne.s32.totalorder %s80, %s81
    %p90 = scmp.eq.s32.totalorder %s14, 0
    %p91 = por %p89, %p90
    %p92 = scmp.ne.s32.totalorder %s80, %s81
    %p93 = scmp.eq.s32.totalorder %s15, 1
    %p94 = por %p92, %p93
    %p96 = scmp.ne.s32.totalorder %s81, %s95
    %p97 = scmp.eq.s32.totalorder %s15, 0
    %p98 = por %p96, %p97
    %s99 = ssub.s32 %s16, %s28
    %s100 = ssub.s32 %s17, %s24
    %s101 = sor.u32 %s99, %s100
    %p102 = scmp.eq.s32.totalorder %s101, 0
    %s104 = sadd.s32 %s103, 1
    %s105 = scalar_select %p102, %s103, %s104
    %p108 = pneg %p102
    %p109 = scmp.eq.s32.totalorder %s9, 1
    %p110 = por %p108, %p109
    %p111 = scmp.ne.s32.totalorder %s103, %s106
    %p112 = scmp.eq.s32.totalorder %s9, 0
    %p113 = por %p111, %p112
    %p114 = scmp.ne.s32.totalorder %s103, %s106
    %p115 = scmp.eq.s32.totalorder %s14, 1
    %p116 = por %p114, %p115
    %p117 = scmp.ne.s32.totalorder %s106, %s107
    %p118 = scmp.eq.s32.totalorder %s14, 0
    %p119 = por %p117, %p118
    %p120 = scmp.ne.s32.totalorder %s106, %s107
    %p121 = scmp.eq.s32.totalorder %s15, 1
    %p122 = por %p120, %p121
    %p124 = scmp.ne.s32.totalorder %s107, %s123
    %p125 = scmp.eq.s32.totalorder %s15, 0
    %p126 = por %p124, %p125
    %p127 = scmp.le.s32.totalorder 1, %s9
    %p128 = scmp.lt.s32.totalorder %s9, 3
    %p129 = pnand %p127, %p128
    %p130 = pneg %p129
    // Predicated region
    $region9: #{conv2d_batchnorm_relu.1} parent=5 // pred_check
      _
    $region10: #{conv2d_batchnorm_relu.1} parent=5 // pred_check_branch
      %132 = sbr.rel (%p129) target = $region12
    $region11: #{conv2d_batchnorm_relu.1} parent=5 // pred_region
      %s133 = ssub.s32 %s9, 1
      // Predicated region
      $region13: #{conv2d_batchnorm_relu.1} parent=11 // pred_check
        %p134 = pneg %p70
      $region14: #{conv2d_batchnorm_relu.1} parent=11 // pred_check_branch
        %136 = sbr.rel (%p134) target = $region16
      $region15: #{conv2d_batchnorm_relu.1} parent=11 // pred_region
        _
      $region16: #{conv2d_batchnorm_relu.1} parent=11 // pred_fallthru
        _
      // Predicated region
      $region17: #{conv2d_batchnorm_relu.1} parent=11 // pred_check
        %p137 = pneg %p91
      $region18: #{conv2d_batchnorm_relu.1} parent=11 // pred_check_branch
        %139 = sbr.rel (%p137) target = $region20
      $region19: #{conv2d_batchnorm_relu.1} parent=11 // pred_region
        _
      $region20: #{conv2d_batchnorm_relu.1} parent=11 // pred_fallthru
        _
    $region12: #{conv2d_batchnorm_relu.1} parent=5 // pred_fallthru
      _
    %p140 = scmp.lt.s32.totalorder %s9, 2
    // Predicated region
    $region21: #{conv2d_batchnorm_relu.1} parent=5 // pred_check
      %p141 = pneg %p140
    $region22: #{conv2d_batchnorm_relu.1} parent=5 // pred_check_branch
      %143 = sbr.rel (%p141) target = $region24
    $region23: #{conv2d_batchnorm_relu.1} parent=5 // pred_region
      // Predicated region
      $region25: #{conv2d_batchnorm_relu.1} parent=23 // pred_check
        %p144 = pneg %p43
      $region26: #{conv2d_batchnorm_relu.1} parent=23 // pred_check_branch
        %146 = sbr.rel (%p144) target = $region28
      $region27: #{conv2d_batchnorm_relu.1} parent=23 // pred_region
        %p147 = scmp.lt.s32.totalorder %s16, 1
        %s148 = scalar_select %p147, %s16, 1
        %p149 = scmp.lt.s32.totalorder %s17, 0
        %s150 = scalar_select %p149, %s17, 0
        %s151 = smul.addr %s150, 54
        %s152 = smul.addr %s148, 54
        %s153 = sadd.s32 %s151, %s152
        %s154 = smul.addr %s153, 4
        %s155 = scalar_lea.vmem %s0, %s154
      $region28: #{conv2d_batchnorm_relu.1} parent=23 // pred_fallthru
        _
    $region24: #{conv2d_batchnorm_relu.1} parent=5 // pred_fallthru
      _
    %p156 = scmp.le.s32.totalorder 1, %s9
    %p157 = scmp.lt.s32.totalorder %s9, 3
    %p158 = pnand %p156, %p157
    %p159 = pneg %p158
    // Predicated region
    $region29: #{conv2d_batchnorm_relu.1} parent=5 // pred_check
      _
    $region30: #{conv2d_batchnorm_relu.1} parent=5 // pred_check_branch
      %161 = sbr.rel (%p158) target = $region32
    $region31: #{conv2d_batchnorm_relu.1} parent=5 // pred_region
      %s162 = ssub.s32 %s9, 1
      %p163 = scmp.lt.s32.totalorder %s18, 1
      %s164 = scalar_select %p163, %s18, 1
      %p165 = scmp.lt.s32.totalorder %s19, 0
      %s166 = scalar_select %p165, %s19, 0
      %s167 = smul.addr %s166, 54
      %s168 = smul.addr %s164, 54
      %s169 = sadd.s32 %s167, %s168
      %s170 = smul.addr %s169, 4
      %s171 = scalar_lea.vmem %s0, %s170
      %p172 = pneg %p49
      %p173 = pneg %p46
      %p174 = pneg %p70
      %p175 = pneg %p67
      %p176 = pneg %p91
      %p177 = pneg %p88
      %p178 = pneg %p119
      %p179 = pneg %p116
      %s180 = smul.u32 16, %s19
      %p181 = scmp.lt.s32.totalorder %s18, 1
      %s182 = scalar_select %p181, %s18, 1
      %p183 = scmp.lt.s32.totalorder %s180, 15
      %s184 = scalar_select %p183, %s180, 15
      %s185 = smul.addr %s184, 2
      %s186 = smul.addr %s182, 32
      %s187 = sadd.s32 %s185, %s186
      %s188 = smul.addr %s187, 8
      %s189 = scalar_lea.vmem %s3, %s188
      %p190 = scmp.lt.s32.totalorder %s18, 1
      %s191 = scalar_select %p190, %s18, 1
      %p192 = scmp.lt.s32.totalorder %s19, 0
      %s193 = scalar_select %p192, %s19, 0
      %s194 = smul.addr %s193, 54
      %s195 = smul.addr %s191, 54
      %s196 = sadd.s32 %s194, %s195
      %s197 = smul.addr %s196, 4
      %s198 = scalar_lea.vmem %s0, %s197
      %s199 = smul.u32 16, %s19
      %p200 = scmp.lt.s32.totalorder %s18, 1
      %s201 = scalar_select %p200, %s18, 1
      %p202 = scmp.lt.s32.totalorder %s199, 15
      %s203 = scalar_select %p202, %s199, 15
      %s204 = smul.addr %s203, 2
      %s205 = smul.addr %s201, 32
      %s206 = sadd.s32 %s204, %s205
      %s207 = smul.addr %s206, 8
      %s208 = scalar_lea.vmem %s3, %s207
      %s209 = smul.u32 16, %s19
      %v211 = vld [vmem:[%s198] sm:$0xf]
      %v212 = vld [vmem:[%s198 + $0x4] sm:$0xf]
      %v213 = vld [vmem:[%s198 + $0x8] sm:$0x1]
      %v214 = vld [vmem:[%s198 + $0xc] sm:$0xf]
      %v215 = vld [vmem:[%s198 + $0x10] sm:$0xf]
      %v216 = vld [vmem:[%s198 + $0x14] sm:$0x1]
      %v217 = vld [vmem:[%s198 + $0x18] sm:$0xf]
      %v218 = vld [vmem:[%s198 + $0x1c] sm:$0xf]
      %v219 = vld [vmem:[%s198 + $0x20] sm:$0x1]
      %v220 = vld [vmem:[%s198 + $0x24] sm:$0xf]
      %v221 = vld [vmem:[%s198 + $0x28] sm:$0xf]
      %v222 = vld [vmem:[%s198 + $0x2c] sm:$0x1]
      %v223 = vld [vmem:[%s198 + $0x30] sm:$0xf]
      %v224 = vld [vmem:[%s198 + $0x34] sm:$0xf]
      %v225 = vld [vmem:[%s198 + $0x38] sm:$0x1]
      %v226 = vld [vmem:[%s198 + $0x3c] sm:$0xf]
      %v227 = vld [vmem:[%s198 + $0x40] sm:$0xf]
      %v228 = vld [vmem:[%s198 + $0x44] sm:$0x1]
      %v229 = vld [vmem:[%s198 + $0x48] sm:$0xf]
      %v230 = vld [vmem:[%s198 + $0x4c] sm:$0xf]
      %v231 = vld [vmem:[%s198 + $0x50] sm:$0x1]
      %v232 = vld [vmem:[%s198 + $0x54] sm:$0xf]
      %v233 = vld [vmem:[%s198 + $0x58] sm:$0xf]
      %v234 = vld [vmem:[%s198 + $0x5c] sm:$0x1]
      %v235 = vld [vmem:[%s198 + $0x60] sm:$0xf]
      %v236 = vld [vmem:[%s198 + $0x64] sm:$0xf]
      %v237 = vld [vmem:[%s198 + $0x68] sm:$0x1]
      %v238 = vld [vmem:[%s198 + $0x6c] sm:$0xf]
      %v239 = vld [vmem:[%s198 + $0x70] sm:$0xf]
      %v240 = vld [vmem:[%s198 + $0x74] sm:$0x1]
      %v241 = vld [vmem:[%s198 + $0x78] sm:$0xf]
      %v242 = vld [vmem:[%s198 + $0x7c] sm:$0xf]
      %v243 = vld [vmem:[%s198 + $0x80] sm:$0x1]
      %v244 = vld [vmem:[%s198 + $0x84] sm:$0xf]
      %v245 = vld [vmem:[%s198 + $0x88] sm:$0xf]
      %v246 = vld [vmem:[%s198 + $0x8c] sm:$0x1]
      %v247 = vld [vmem:[%s198 + $0x90] sm:$0xf]
      %v248 = vld [vmem:[%s198 + $0x94] sm:$0xf]
      %v249 = vld [vmem:[%s198 + $0x98] sm:$0x1]
      %v250 = vld [vmem:[%s198 + $0x9c] sm:$0xf]
      %v251 = vld [vmem:[%s198 + $0xa0] sm:$0xf]
      %v252 = vld [vmem:[%s198 + $0xa4] sm:$0x1]
      %v253 = vld [vmem:[%s198 + $0xa8] sm:$0xf]
      %v254 = vld [vmem:[%s198 + $0xac] sm:$0xf]
      %v255 = vld [vmem:[%s198 + $0xb0] sm:$0x1]
      %v256 = vld [vmem:[%s198 + $0xb4] sm:$0xf]
      %v257 = vld [vmem:[%s198 + $0xb8] sm:$0xf]
      %v258 = vld [vmem:[%s198 + $0xbc] sm:$0x1]
      %v259 = vld [vmem:[%s198 + $0xc0] sm:$0xf]
      %v260 = vld [vmem:[%s198 + $0xc4] sm:$0xf]
      %v261 = vld [vmem:[%s198 + $0xc8] sm:$0x1]
      %v262 = vld [vmem:[%s198 + $0xcc] sm:$0xf]
      %v263 = vld [vmem:[%s198 + $0xd0] sm:$0xf]
      %v264 = vld [vmem:[%s198 + $0xd4] sm:$0x1]
      %v265 = vld [vmem:[%s2] sm:$0x1]
      %v267 = vlaneseq
      %v268 = vshrl.u32 %v267, 7
      %v269 = vsub.s32 0, %v268
      %v270 = vrot.slane %v265, %v269
      %v272 = vld [vmem:[%s1] sm:$0x3]
      %v305 = vunpack.c.l.b16 %v211
      %v306 = vunpack.c.l.b16 %v212
      %v307 = vunpack.c.l.b16 %v214
      %v308 = vunpack.c.l.b16 %v215
      %v309 = vunpack.c.l.b16 %v217
      %v310 = vunpack.c.l.b16 %v218
      %v311 = vunpack.c.l.b16 %v220
      %v312 = vunpack.c.l.b16 %v221
      %v313 = vunpack.c.l.b16 %v223
      %v314 = vunpack.c.l.b16 %v224
      %v315 = vunpack.c.l.b16 %v226
      %v316 = vunpack.c.l.b16 %v227
      %v317 = vunpack.c.l.b16 %v229
      %v318 = vunpack.c.l.b16 %v230
      %v319 = vunpack.c.l.b16 %v232
      %v320 = vunpack.c.l.b16 %v233
      %v321 = vunpack.c.l.b16 %v235
      %v322 = vunpack.c.l.b16 %v236
      %v323 = vunpack.c.l.b16 %v238
      %v324 = vunpack.c.l.b16 %v239
      %v325 = vunpack.c.l.b16 %v241
      %v326 = vunpack.c.l.b16 %v242
      %v327 = vunpack.c.l.b16 %v244
      %v328 = vunpack.c.l.b16 %v245
      %v329 = vunpack.c.l.b16 %v247
      %v330 = vunpack.c.l.b16 %v248
      %v331 = vunpack.c.l.b16 %v250
      %v332 = vunpack.c.l.b16 %v251
      %v333 = vunpack.c.l.b16 %v253
      %v334 = vunpack.c.l.b16 %v254
      %v335 = vunpack.c.l.b16 %v256
      %v336 = vunpack.c.l.b16 %v257
      %v337 = vpack.c.b16 %v306, %v305
      %v338 = vpack.c.b16 %v308, %v307
      %v339 = vpack.c.b16 %v310, %v309
      %v340 = vpack.c.b16 %v312, %v311
      %v341 = vpack.c.b16 %v314, %v313
      %v342 = vpack.c.b16 %v316, %v315
      %v343 = vpack.c.b16 %v318, %v317
      %v344 = vpack.c.b16 %v320, %v319
      %v345 = vpack.c.b16 %v322, %v321
      %v346 = vpack.c.b16 %v324, %v323
      %v347 = vpack.c.b16 %v326, %v325
      %v348 = vpack.c.b16 %v328, %v327
      %v349 = vpack.c.b16 %v330, %v329
      %v350 = vpack.c.b16 %v332, %v331
      %v351 = vpack.c.b16 %v334, %v333
      %v352 = vpack.c.b16 %v336, %v335
      %vm353 = vcmask 31744
      %v355 = vsel %vm353, %v337, 0
      %v358 = vsel %vm353, %v338, 0
      %v361 = vsel %vm353, %v339, 0
      %v364 = vsel %vm353, %v340, 0
      %v367 = vsel %vm353, %v341, 0
      %v370 = vsel %vm353, %v342, 0
      %v373 = vsel %vm353, %v343, 0
      %v376 = vsel %vm353, %v344, 0
      %v379 = vsel %vm353, %v345, 0
      %v382 = vsel %vm353, %v346, 0
      %v385 = vsel %vm353, %v347, 0
      %v388 = vsel %vm353, %v348, 0
      %v391 = vsel %vm353, %v349, 0
      %v394 = vsel %vm353, %v350, 0
      %v397 = vsel %vm353, %v351, 0
      %v400 = vsel %vm353, %v352, 0
      %vm402 = vcmask 1041408
      %v404 = vsel %vm402, %v272, 0
      %406 = vmatprep.subr.bf16.mxu0 0
      %407 = vmatpush1.bf16.msra.mxu0 0
      %408 = vmatprep.subr.bf16.mxu0 0
      %409 = vmatpush1.bf16.msra.mxu0 0
      %410 = vmatprep.subr.bf16.mxu0 0
      %411 = vmatpush1.bf16.msra.mxu0 0
      %412 = vmatprep.subr.bf16.mxu0 0
      %413 = vmatpush1.bf16.msra.mxu0 0
      %414 = vmatprep.subr.bf16.mxu0 0
      %415 = vmatpush1.bf16.msra.mxu0 0
      %416 = vmatprep.subr.bf16.mxu0 0
      %417 = vmatpush1.bf16.msra.mxu0 0
      %418 = vmatprep.subr.bf16.mxu0 0
      %419 = vmatpush1.bf16.msra.mxu0 0
      %420 = vmatprep.subr.bf16.mxu0 0
      %421 = vmatpush1.bf16.msra.mxu0 %v404
      %422 = vmatprep.subr.bf16.mxu0 0
      %423 = vmatpush2.bf16.msra.mxu0 0
      %424 = vmatprep.subr.bf16.mxu0 0
      %425 = vmatpush2.bf16.msra.mxu0 0
      %426 = vmatprep.subr.bf16.mxu0 0
      %427 = vmatpush2.bf16.msra.mxu0 0
      %428 = vmatprep.subr.bf16.mxu0 0
      %429 = vmatpush2.bf16.msra.mxu0 0
      %430 = vmatprep.subr.bf16.mxu0 0
      %431 = vmatpush2.bf16.msra.mxu0 0
      %432 = vmatprep.subr.bf16.mxu0 0
      %433 = vmatpush2.bf16.msra.mxu0 0
      %434 = vmatprep.subr.bf16.mxu0 0
      %435 = vmatpush2.bf16.msra.mxu0 0
      %436 = vmatprep.subr.bf16.mxu0 0
      %437 = vmatpush2.bf16.msra.mxu0 0
      %438 = vmatprep.mubr.bf16.mxu0 0
      %439 = vmatmul.mubr.bf16.gmra.mxu0 %v355
      %v440 = vpop.f32.mrf.mxu0
      %v441 = vadd.f32 0.0, %v440
      %v442 = vpop.f32.mrf.mxu0
      %v443 = vpop.f32.mrf.mxu0
      %v444 = vadd.f32 0.0, %v443
      %v445 = vpop.f32.mrf.mxu0
      %446 = vmatprep.mubr.bf16.mxu0 0
      %447 = vmatmul.mubr.bf16.gmra.mxu0 %v358
      %v448 = vpop.f32.mrf.mxu0
      %v449 = vadd.f32 0.0, %v448
      %v450 = vpop.f32.mrf.mxu0
      %v451 = vpop.f32.mrf.mxu0
      %v452 = vadd.f32 0.0, %v451
      %v453 = vpop.f32.mrf.mxu0
      %454 = vmatprep.mubr.bf16.mxu0 0
      %455 = vmatmul.mubr.bf16.gmra.mxu0 %v361
      %v456 = vpop.f32.mrf.mxu0
      %v457 = vadd.f32 0.0, %v456
      %v458 = vpop.f32.mrf.mxu0
      %v459 = vpop.f32.mrf.mxu0
      %v460 = vadd.f32 0.0, %v459
      %v461 = vpop.f32.mrf.mxu0
      %462 = vmatprep.mubr.bf16.mxu0 0
      %463 = vmatmul.mubr.bf16.gmra.mxu0 %v364
      %v464 = vpop.f32.mrf.mxu0
      %v465 = vadd.f32 0.0, %v464
      %v466 = vpop.f32.mrf.mxu0
      %v467 = vpop.f32.mrf.mxu0
      %v468 = vadd.f32 0.0, %v467
      %v469 = vpop.f32.mrf.mxu0
      %470 = vmatprep.mubr.bf16.mxu0 0
      %471 = vmatmul.mubr.bf16.gmra.mxu0 %v367
      %v472 = vpop.f32.mrf.mxu0
      %v473 = vadd.f32 0.0, %v472
      %v474 = vpop.f32.mrf.mxu0
      %v475 = vpop.f32.mrf.mxu0
      %v476 = vadd.f32 0.0, %v475
      %v477 = vpop.f32.mrf.mxu0
      %478 = vmatprep.mubr.bf16.mxu0 0
      %479 = vmatmul.mubr.bf16.gmra.mxu0 %v370
      %v480 = vpop.f32.mrf.mxu0
      %v481 = vadd.f32 0.0, %v480
      %v482 = vpop.f32.mrf.mxu0
      %v483 = vpop.f32.mrf.mxu0
      %v484 = vadd.f32 0.0, %v483
      %v485 = vpop.f32.mrf.mxu0
      %486 = vmatprep.mubr.bf16.mxu0 0
      %487 = vmatmul.mubr.bf16.gmra.mxu0 %v373
      %v488 = vpop.f32.mrf.mxu0
      %v489 = vadd.f32 0.0, %v488
      %v490 = vpop.f32.mrf.mxu0
      %v491 = vpop.f32.mrf.mxu0
      %v492 = vadd.f32 0.0, %v491
      %v493 = vpop.f32.mrf.mxu0
      %494 = vmatprep.mubr.bf16.mxu0 0
      %495 = vmatmul.mubr.bf16.gmra.mxu0 %v376
      %v496 = vpop.f32.mrf.mxu0
      %v497 = vadd.f32 0.0, %v496
      %v498 = vpop.f32.mrf.mxu0
      %v499 = vpop.f32.mrf.mxu0
      %v500 = vadd.f32 0.0, %v499
      %v501 = vpop.f32.mrf.mxu0
      %502 = vmatprep.mubr.bf16.mxu0 0
      %503 = vmatmul.mubr.bf16.gmra.mxu0 %v379
      %v504 = vpop.f32.mrf.mxu0
      %v505 = vadd.f32 0.0, %v504
      %v506 = vpop.f32.mrf.mxu0
      %v507 = vpop.f32.mrf.mxu0
      %v508 = vadd.f32 0.0, %v507
      %v509 = vpop.f32.mrf.mxu0
      %510 = vmatprep.mubr.bf16.mxu0 0
      %511 = vmatmul.mubr.bf16.gmra.mxu0 %v382
      %v512 = vpop.f32.mrf.mxu0
      %v513 = vadd.f32 0.0, %v512
      %v514 = vpop.f32.mrf.mxu0
      %v515 = vpop.f32.mrf.mxu0
      %v516 = vadd.f32 0.0, %v515
      %v517 = vpop.f32.mrf.mxu0
      %518 = vmatprep.mubr.bf16.mxu0 0
      %519 = vmatmul.mubr.bf16.gmra.mxu0 %v385
      %v520 = vpop.f32.mrf.mxu0
      %v521 = vadd.f32 0.0, %v520
      %v522 = vpop.f32.mrf.mxu0
      %v523 = vpop.f32.mrf.mxu0
      %v524 = vadd.f32 0.0, %v523
      %v525 = vpop.f32.mrf.mxu0
      %526 = vmatprep.mubr.bf16.mxu0 0
      %527 = vmatmul.mubr.bf16.gmra.mxu0 %v388
      %v528 = vpop.f32.mrf.mxu0
      %v529 = vadd.f32 0.0, %v528
      %v530 = vpop.f32.mrf.mxu0
      %v531 = vpop.f32.mrf.mxu0
      %v532 = vadd.f32 0.0, %v531
      %v533 = vpop.f32.mrf.mxu0
      %534 = vmatprep.mubr.bf16.mxu0 0
      %535 = vmatmul.mubr.bf16.gmra.mxu0 %v391
      %v536 = vpop.f32.mrf.mxu0
      %v537 = vadd.f32 0.0, %v536
      %v538 = vpop.f32.mrf.mxu0
      %v539 = vpop.f32.mrf.mxu0
      %v540 = vadd.f32 0.0, %v539
      %v541 = vpop.f32.mrf.mxu0
      %542 = vmatprep.mubr.bf16.mxu0 0
      %543 = vmatmul.mubr.bf16.gmra.mxu0 %v394
      %v544 = vpop.f32.mrf.mxu0
      %v545 = vadd.f32 0.0, %v544
      %v546 = vpop.f32.mrf.mxu0
      %v547 = vpop.f32.mrf.mxu0
      %v548 = vadd.f32 0.0, %v547
      %v549 = vpop.f32.mrf.mxu0
      %550 = vmatprep.mubr.bf16.mxu0 0
      %551 = vmatmul.mubr.bf16.gmra.mxu0 %v397
      %v552 = vpop.f32.mrf.mxu0
      %v553 = vadd.f32 0.0, %v552
      %v554 = vpop.f32.mrf.mxu0
      %v555 = vpop.f32.mrf.mxu0
      %v556 = vadd.f32 0.0, %v555
      %v557 = vpop.f32.mrf.mxu0
      %558 = vmatprep.mubr.bf16.mxu0 0
      %559 = vmatmul.mubr.bf16.gmra.mxu0 %v400
      %v560 = vpop.f32.mrf.mxu0
      %v561 = vadd.f32 0.0, %v560
      %v562 = vpop.f32.mrf.mxu0
      %v563 = vpop.f32.mrf.mxu0
      %v564 = vadd.f32 0.0, %v563
      %v565 = vpop.f32.mrf.mxu0
      %566 = vdwg.mxu0
      %v567 = vadd.f32 %v270, %v441
      %v568 = vadd.f32 %v270, %v444
      %v569 = vadd.f32 %v270, %v449
      %v570 = vadd.f32 %v270, %v452
      %v571 = vadd.f32 %v270, %v457
      %v572 = vadd.f32 %v270, %v460
      %v573 = vadd.f32 %v270, %v465
      %v574 = vadd.f32 %v270, %v468
      %v575 = vadd.f32 %v270, %v473
      %v576 = vadd.f32 %v270, %v476
      %v577 = vadd.f32 %v270, %v481
      %v578 = vadd.f32 %v270, %v484
      %v579 = vadd.f32 %v270, %v489
      %v580 = vadd.f32 %v270, %v492
      %v581 = vadd.f32 %v270, %v497
      %v582 = vadd.f32 %v270, %v500
      %v583 = vadd.f32 %v270, %v505
      %v584 = vadd.f32 %v270, %v508
      %v585 = vadd.f32 %v270, %v513
      %v586 = vadd.f32 %v270, %v516
      %v587 = vadd.f32 %v270, %v521
      %v588 = vadd.f32 %v270, %v524
      %v589 = vadd.f32 %v270, %v529
      %v590 = vadd.f32 %v270, %v532
      %v591 = vadd.f32 %v270, %v537
      %v592 = vadd.f32 %v270, %v540
      %v593 = vadd.f32 %v270, %v545
      %v594 = vadd.f32 %v270, %v548
      %v595 = vadd.f32 %v270, %v553
      %v596 = vadd.f32 %v270, %v556
      %v597 = vadd.f32 %v270, %v561
      %v598 = vadd.f32 %v270, %v564
      %vm599 = vsmask.f32 3328
      %vm600 = vsmask.f32 7440
      %vm601 = vmor %vm599, %vm600
      %v603 = vshrl.u32 %v211, 16
      %v605 = vrot.slane %v603, 4
      %v606 = vshll.u32 %v211, 16
      %v608 = vrot.slane %v606, 5
      %v609 = vor.u32 %v605, %v608
      %v610 = vrot.slane %v609, 4
      %v612 = vshll.u32 %v212, 16
      %v614 = vrot.slane %v612, 5
      %v615 = vsel %vm601, %v610, %v614
      %v616 = vshrl.u32 %v212, 16
      %v618 = vrot.slane %v616, 4
      %v619 = vor.u32 %v618, %v614
      %v620 = vrot.slane %v619, 4
      %v622 = vshll.u32 %v213, 16
      %v624 = vrot.slane %v622, 5
      %v625 = vsel %vm601, %v620, %v624
      %v627 = vshrl.u32 %v214, 16
      %v629 = vrot.slane %v627, 4
      %v630 = vshll.u32 %v214, 16
      %v632 = vrot.slane %v630, 5
      %v633 = vor.u32 %v629, %v632
      %v634 = vrot.slane %v633, 4
      %v636 = vshll.u32 %v215, 16
      %v638 = vrot.slane %v636, 5
      %v639 = vsel %vm601, %v634, %v638
      %v640 = vshrl.u32 %v215, 16
      %v642 = vrot.slane %v640, 4
      %v643 = vor.u32 %v642, %v638
      %v644 = vrot.slane %v643, 4
      %v646 = vshll.u32 %v216, 16
      %v648 = vrot.slane %v646, 5
      %v649 = vsel %vm601, %v644, %v648
      %v651 = vshrl.u32 %v217, 16
      %v653 = vrot.slane %v651, 4
      %v654 = vshll.u32 %v217, 16
      %v656 = vrot.slane %v654, 5
      %v657 = vor.u32 %v653, %v656
      %v658 = vrot.slane %v657, 4
      %v660 = vshll.u32 %v218, 16
      %v662 = vrot.slane %v660, 5
      %v663 = vsel %vm601, %v658, %v662
      %v664 = vshrl.u32 %v218, 16
      %v666 = vrot.slane %v664, 4
      %v667 = vor.u32 %v666, %v662
      %v668 = vrot.slane %v667, 4
      %v670 = vshll.u32 %v219, 16
      %v672 = vrot.slane %v670, 5
      %v673 = vsel %vm601, %v668, %v672
      %v675 = vshrl.u32 %v220, 16
      %v677 = vrot.slane %v675, 4
      %v678 = vshll.u32 %v220, 16
      %v680 = vrot.slane %v678, 5
      %v681 = vor.u32 %v677, %v680
      %v682 = vrot.slane %v681, 4
      %v684 = vshll.u32 %v221, 16
      %v686 = vrot.slane %v684, 5
      %v687 = vsel %vm601, %v682, %v686
      %v688 = vshrl.u32 %v221, 16
      %v690 = vrot.slane %v688, 4
      %v691 = vor.u32 %v690, %v686
      %v692 = vrot.slane %v691, 4
      %v694 = vshll.u32 %v222, 16
      %v696 = vrot.slane %v694, 5
      %v697 = vsel %vm601, %v692, %v696
      %v699 = vshrl.u32 %v223, 16
      %v701 = vrot.slane %v699, 4
      %v702 = vshll.u32 %v223, 16
      %v704 = vrot.slane %v702, 5
      %v705 = vor.u32 %v701, %v704
      %v706 = vrot.slane %v705, 4
      %v708 = vshll.u32 %v224, 16
      %v710 = vrot.slane %v708, 5
      %v711 = vsel %vm601, %v706, %v710
      %v712 = vshrl.u32 %v224, 16
      %v714 = vrot.slane %v712, 4
      %v715 = vor.u32 %v714, %v710
      %v716 = vrot.slane %v715, 4
      %v718 = vshll.u32 %v225, 16
      %v720 = vrot.slane %v718, 5
      %v721 = vsel %vm601, %v716, %v720
      %v723 = vshrl.u32 %v226, 16
      %v725 = vrot.slane %v723, 4
      %v726 = vshll.u32 %v226, 16
      %v728 = vrot.slane %v726, 5
      %v729 = vor.u32 %v725, %v728
      %v730 = vrot.slane %v729, 4
      %v732 = vshll.u32 %v227, 16
      %v734 = vrot.slane %v732, 5
      %v735 = vsel %vm601, %v730, %v734
      %v736 = vshrl.u32 %v227, 16
      %v738 = vrot.slane %v736, 4
      %v739 = vor.u32 %v738, %v734
      %v740 = vrot.slane %v739, 4
      %v742 = vshll.u32 %v228, 16
      %v744 = vrot.slane %v742, 5
      %v745 = vsel %vm601, %v740, %v744
      %v747 = vshrl.u32 %v229, 16
      %v749 = vrot.slane %v747, 4
      %v750 = vshll.u32 %v229, 16
      %v752 = vrot.slane %v750, 5
      %v753 = vor.u32 %v749, %v752
      %v754 = vrot.slane %v753, 4
      %v756 = vshll.u32 %v230, 16
      %v758 = vrot.slane %v756, 5
      %v759 = vsel %vm601, %v754, %v758
      %v760 = vshrl.u32 %v230, 16
      %v762 = vrot.slane %v760, 4
      %v763 = vor.u32 %v762, %v758
      %v764 = vrot.slane %v763, 4
      %v766 = vshll.u32 %v231, 16
      %v768 = vrot.slane %v766, 5
      %v769 = vsel %vm601, %v764, %v768
      %v771 = vshrl.u32 %v232, 16
      %v773 = vrot.slane %v771, 4
      %v774 = vshll.u32 %v232, 16
      %v776 = vrot.slane %v774, 5
      %v777 = vor.u32 %v773, %v776
      %v778 = vrot.slane %v777, 4
      %v780 = vshll.u32 %v233, 16
      %v782 = vrot.slane %v780, 5
      %v783 = vsel %vm601, %v778, %v782
      %v784 = vshrl.u32 %v233, 16
      %v786 = vrot.slane %v784, 4
      %v787 = vor.u32 %v786, %v782
      %v788 = vrot.slane %v787, 4
      %v790 = vshll.u32 %v234, 16
      %v792 = vrot.slane %v790, 5
      %v793 = vsel %vm601, %v788, %v792
      %v795 = vshrl.u32 %v235, 16
      %v797 = vrot.slane %v795, 4
      %v798 = vshll.u32 %v235, 16
      %v800 = vrot.slane %v798, 5
      %v801 = vor.u32 %v797, %v800
      %v802 = vrot.slane %v801, 4
      %v804 = vshll.u32 %v236, 16
      %v806 = vrot.slane %v804, 5
      %v807 = vsel %vm601, %v802, %v806
      %v808 = vshrl.u32 %v236, 16
      %v810 = vrot.slane %v808, 4
      %v811 = vor.u32 %v810, %v806
      %v812 = vrot.slane %v811, 4
      %v814 = vshll.u32 %v237, 16
      %v816 = vrot.slane %v814, 5
      %v817 = vsel %vm601, %v812, %v816
      %v819 = vshrl.u32 %v238, 16
      %v821 = vrot.slane %v819, 4
      %v822 = vshll.u32 %v238, 16
      %v824 = vrot.slane %v822, 5
      %v825 = vor.u32 %v821, %v824
      %v826 = vrot.slane %v825, 4
      %v828 = vshll.u32 %v239, 16
      %v830 = vrot.slane %v828, 5
      %v831 = vsel %vm601, %v826, %v830
      %v832 = vshrl.u32 %v239, 16
      %v834 = vrot.slane %v832, 4
      %v835 = vor.u32 %v834, %v830
      %v836 = vrot.slane %v835, 4
      %v838 = vshll.u32 %v240, 16
      %v840 = vrot.slane %v838, 5
      %v841 = vsel %vm601, %v836, %v840
      %v843 = vshrl.u32 %v241, 16
      %v845 = vrot.slane %v843, 4
      %v846 = vshll.u32 %v241, 16
      %v848 = vrot.slane %v846, 5
      %v849 = vor.u32 %v845, %v848
      %v850 = vrot.slane %v849, 4
      %v852 = vshll.u32 %v242, 16
      %v854 = vrot.slane %v852, 5
      %v855 = vsel %vm601, %v850, %v854
      %v856 = vshrl.u32 %v242, 16
      %v858 = vrot.slane %v856, 4
      %v859 = vor.u32 %v858, %v854
      %v860 = vrot.slane %v859, 4
      %v862 = vshll.u32 %v243, 16
      %v864 = vrot.slane %v862, 5
      %v865 = vsel %vm601, %v860, %v864
      %v867 = vshrl.u32 %v244, 16
      %v869 = vrot.slane %v867, 4
      %v870 = vshll.u32 %v244, 16
      %v872 = vrot.slane %v870, 5
      %v873 = vor.u32 %v869, %v872
      %v874 = vrot.slane %v873, 4
      %v876 = vshll.u32 %v245, 16
      %v878 = vrot.slane %v876, 5
      %v879 = vsel %vm601, %v874, %v878
      %v880 = vshrl.u32 %v245, 16
      %v882 = vrot.slane %v880, 4
      %v883 = vor.u32 %v882, %v878
      %v884 = vrot.slane %v883, 4
      %v886 = vshll.u32 %v246, 16
      %v888 = vrot.slane %v886, 5
      %v889 = vsel %vm601, %v884, %v888
      %v891 = vshrl.u32 %v247, 16
      %v893 = vrot.slane %v891, 4
      %v894 = vshll.u32 %v247, 16
      %v896 = vrot.slane %v894, 5
      %v897 = vor.u32 %v893, %v896
      %v898 = vrot.slane %v897, 4
      %v900 = vshll.u32 %v248, 16
      %v902 = vrot.slane %v900, 5
      %v903 = vsel %vm601, %v898, %v902
      %v904 = vshrl.u32 %v248, 16
      %v906 = vrot.slane %v904, 4
      %v907 = vor.u32 %v906, %v902
      %v908 = vrot.slane %v907, 4
      %v910 = vshll.u32 %v249, 16
      %v912 = vrot.slane %v910, 5
      %v913 = vsel %vm601, %v908, %v912
      %v915 = vshrl.u32 %v250, 16
      %v917 = vrot.slane %v915, 4
      %v918 = vshll.u32 %v250, 16
      %v920 = vrot.slane %v918, 5
      %v921 = vor.u32 %v917, %v920
      %v922 = vrot.slane %v921, 4
      %v924 = vshll.u32 %v251, 16
      %v926 = vrot.slane %v924, 5
      %v927 = vsel %vm601, %v922, %v926
      %v928 = vshrl.u32 %v251, 16
      %v930 = vrot.slane %v928, 4
      %v931 = vor.u32 %v930, %v926
      %v932 = vrot.slane %v931, 4
      %v934 = vshll.u32 %v252, 16
      %v936 = vrot.slane %v934, 5
      %v937 = vsel %vm601, %v932, %v936
      %v939 = vshrl.u32 %v253, 16
      %v941 = vrot.slane %v939, 4
      %v942 = vshll.u32 %v253, 16
      %v944 = vrot.slane %v942, 5
      %v945 = vor.u32 %v941, %v944
      %v946 = vrot.slane %v945, 4
      %v948 = vshll.u32 %v254, 16
      %v950 = vrot.slane %v948, 5
      %v951 = vsel %vm601, %v946, %v950
      %v952 = vshrl.u32 %v254, 16
      %v954 = vrot.slane %v952, 4
      %v955 = vor.u32 %v954, %v950
      %v956 = vrot.slane %v955, 4
      %v958 = vshll.u32 %v255, 16
      %v960 = vrot.slane %v958, 5
      %v961 = vsel %vm601, %v956, %v960
      %v963 = vshrl.u32 %v256, 16
      %v965 = vrot.slane %v963, 4
      %v966 = vshll.u32 %v256, 16
      %v968 = vrot.slane %v966, 5
      %v969 = vor.u32 %v965, %v968
      %v970 = vrot.slane %v969, 4
      %v972 = vshll.u32 %v257, 16
      %v974 = vrot.slane %v972, 5
      %v975 = vsel %vm601, %v970, %v974
      %v976 = vshrl.u32 %v257, 16
      %v978 = vrot.slane %v976, 4
      %v979 = vor.u32 %v978, %v974
      %v980 = vrot.slane %v979, 4
      %v982 = vshll.u32 %v258, 16
      %v984 = vrot.slane %v982, 5
      %v985 = vsel %vm601, %v980, %v984
      %s986 = scalar_lea.vmem %s1, 2
      %v987 = vld [vmem:[%s986] sm:$0x3]
      %v988 = vunpack.c.l.b16 %v615
      %v989 = vunpack.c.l.b16 %v625
      %v990 = vunpack.c.l.b16 %v639
      %v991 = vunpack.c.l.b16 %v649
      %v992 = vunpack.c.l.b16 %v663
      %v993 = vunpack.c.l.b16 %v673
      %v994 = vunpack.c.l.b16 %v687
      %v995 = vunpack.c.l.b16 %v697
      %v996 = vunpack.c.l.b16 %v711
      %v997 = vunpack.c.l.b16 %v721
      %v998 = vunpack.c.l.b16 %v735
      %v999 = vunpack.c.l.b16 %v745
      %v1000 = vunpack.c.l.b16 %v759
      %v1001 = vunpack.c.l.b16 %v769
      %v1002 = vunpack.c.l.b16 %v783
      %v1003 = vunpack.c.l.b16 %v793
      %v1004 = vunpack.c.l.b16 %v807
      %v1005 = vunpack.c.l.b16 %v817
      %v1006 = vunpack.c.l.b16 %v831
      %v1007 = vunpack.c.l.b16 %v841
      %v1008 = vunpack.c.l.b16 %v855
      %v1009 = vunpack.c.l.b16 %v865
      %v1010 = vunpack.c.l.b16 %v879
      %v1011 = vunpack.c.l.b16 %v889
      %v1012 = vunpack.c.l.b16 %v903
      %v1013 = vunpack.c.l.b16 %v913
      %v1014 = vunpack.c.l.b16 %v927
      %v1015 = vunpack.c.l.b16 %v937
      %v1016 = vunpack.c.l.b16 %v951
      %v1017 = vunpack.c.l.b16 %v961
      %v1018 = vunpack.c.l.b16 %v975
      %v1019 = vunpack.c.l.b16 %v985
      %v1020 = vpack.c.b16 %v989, %v988
      %v1021 = vpack.c.b16 %v991, %v990
      %v1022 = vpack.c.b16 %v993, %v992
      %v1023 = vpack.c.b16 %v995, %v994
      %v1024 = vpack.c.b16 %v997, %v996
      %v1025 = vpack.c.b16 %v999, %v998
      %v1026 = vpack.c.b16 %v1001, %v1000
      %v1027 = vpack.c.b16 %v1003, %v1002
      %v1028 = vpack.c.b16 %v1005, %v1004
      %v1029 = vpack.c.b16 %v1007, %v1006
      %v1030 = vpack.c.b16 %v1009, %v1008
      %v1031 = vpack.c.b16 %v1011, %v1010
      %v1032 = vpack.c.b16 %v1013, %v1012
      %v1033 = vpack.c.b16 %v1015, %v1014
      %v1034 = vpack.c.b16 %v1017, %v1016
      %v1035 = vpack.c.b16 %v1019, %v1018
      %v1037 = vsel %vm353, %v1020, 0
      %v1040 = vsel %vm353, %v1021, 0
      %v1043 = vsel %vm353, %v1022, 0
      %v1046 = vsel %vm353, %v1023, 0
      %v1049 = vsel %vm353, %v1024, 0
      %v1052 = vsel %vm353, %v1025, 0
      %v1055 = vsel %vm353, %v1026, 0
      %v1058 = vsel %vm353, %v1027, 0
      %v1061 = vsel %vm353, %v1028, 0
      %v1064 = vsel %vm353, %v1029, 0
      %v1067 = vsel %vm353, %v1030, 0
      %v1070 = vsel %vm353, %v1031, 0
      %v1073 = vsel %vm353, %v1032, 0
      %v1076 = vsel %vm353, %v1033, 0
      %v1079 = vsel %vm353, %v1034, 0
      %v1082 = vsel %vm353, %v1035, 0
      %v1085 = vsel %vm402, %v987, 0
      %1087 = vmatprep.subr.bf16.mxu0 0
      %1088 = vmatpush1.bf16.msra.mxu0 0
      %1089 = vmatprep.subr.bf16.mxu0 0
      %1090 = vmatpush1.bf16.msra.mxu0 0
      %1091 = vmatprep.subr.bf16.mxu0 0
      %1092 = vmatpush1.bf16.msra.mxu0 0
      %1093 = vmatprep.subr.bf16.mxu0 0
      %1094 = vmatpush1.bf16.msra.mxu0 0
      %1095 = vmatprep.subr.bf16.mxu0 0
      %1096 = vmatpush1.bf16.msra.mxu0 0
      %1097 = vmatprep.subr.bf16.mxu0 0
      %1098 = vmatpush1.bf16.msra.mxu0 0
      %1099 = vmatprep.subr.bf16.mxu0 0
      %1100 = vmatpush1.bf16.msra.mxu0 0
      %1101 = vmatprep.subr.bf16.mxu0 0
      %1102 = vmatpush1.bf16.msra.mxu0 %v1085
      %1103 = vmatprep.subr.bf16.mxu0 0
      %1104 = vmatpush2.bf16.msra.mxu0 0
      %1105 = vmatprep.subr.bf16.mxu0 0
      %1106 = vmatpush2.bf16.msra.mxu0 0
      %1107 = vmatprep.subr.bf16.mxu0 0
      %1108 = vmatpush2.bf16.msra.mxu0 0
      %1109 = vmatprep.subr.bf16.mxu0 0
      %1110 = vmatpush2.bf16.msra.mxu0 0
      %1111 = vmatprep.subr.bf16.mxu0 0
      %1112 = vmatpush2.bf16.msra.mxu0 0
      %1113 = vmatprep.subr.bf16.mxu0 0
      %1114 = vmatpush2.bf16.msra.mxu0 0
      %1115 = vmatprep.subr.bf16.mxu0 0
      %1116 = vmatpush2.bf16.msra.mxu0 0
      %1117 = vmatprep.subr.bf16.mxu0 0
      %1118 = vmatpush2.bf16.msra.mxu0 0
      %1119 = vmatprep.mubr.bf16.mxu0 0
      %1120 = vmatmul.mubr.bf16.gmra.mxu0 %v1037
      %v1121 = vpop.f32.mrf.mxu0
      %v1122 = vadd.f32 0.0, %v1121
      %v1123 = vpop.f32.mrf.mxu0
      %v1124 = vpop.f32.mrf.mxu0
      %v1125 = vadd.f32 0.0, %v1124
      %v1126 = vpop.f32.mrf.mxu0
      %1127 = vmatprep.mubr.bf16.mxu0 0
      %1128 = vmatmul.mubr.bf16.gmra.mxu0 %v1040
      %v1129 = vpop.f32.mrf.mxu0
      %v1130 = vadd.f32 0.0, %v1129
      %v1131 = vpop.f32.mrf.mxu0
      %v1132 = vpop.f32.mrf.mxu0
      %v1133 = vadd.f32 0.0, %v1132
      %v1134 = vpop.f32.mrf.mxu0
      %1135 = vmatprep.mubr.bf16.mxu0 0
      %1136 = vmatmul.mubr.bf16.gmra.mxu0 %v1043
      %v1137 = vpop.f32.mrf.mxu0
      %v1138 = vadd.f32 0.0, %v1137
      %v1139 = vpop.f32.mrf.mxu0
      %v1140 = vpop.f32.mrf.mxu0
      %v1141 = vadd.f32 0.0, %v1140
      %v1142 = vpop.f32.mrf.mxu0
      %1143 = vmatprep.mubr.bf16.mxu0 0
      %1144 = vmatmul.mubr.bf16.gmra.mxu0 %v1046
      %v1145 = vpop.f32.mrf.mxu0
      %v1146 = vadd.f32 0.0, %v1145
      %v1147 = vpop.f32.mrf.mxu0
      %v1148 = vpop.f32.mrf.mxu0
      %v1149 = vadd.f32 0.0, %v1148
      %v1150 = vpop.f32.mrf.mxu0
      %1151 = vmatprep.mubr.bf16.mxu0 0
      %1152 = vmatmul.mubr.bf16.gmra.mxu0 %v1049
      %v1153 = vpop.f32.mrf.mxu0
      %v1154 = vadd.f32 0.0, %v1153
      %v1155 = vpop.f32.mrf.mxu0
      %v1156 = vpop.f32.mrf.mxu0
      %v1157 = vadd.f32 0.0, %v1156
      %v1158 = vpop.f32.mrf.mxu0
      %1159 = vmatprep.mubr.bf16.mxu0 0
      %1160 = vmatmul.mubr.bf16.gmra.mxu0 %v1052
      %v1161 = vpop.f32.mrf.mxu0
      %v1162 = vadd.f32 0.0, %v1161
      %v1163 = vpop.f32.mrf.mxu0
      %v1164 = vpop.f32.mrf.mxu0
      %v1165 = vadd.f32 0.0, %v1164
      %v1166 = vpop.f32.mrf.mxu0
      %1167 = vmatprep.mubr.bf16.mxu0 0
      %1168 = vmatmul.mubr.bf16.gmra.mxu0 %v1055
      %v1169 = vpop.f32.mrf.mxu0
      %v1170 = vadd.f32 0.0, %v1169
      %v1171 = vpop.f32.mrf.mxu0
      %v1172 = vpop.f32.mrf.mxu0
      %v1173 = vadd.f32 0.0, %v1172
      %v1174 = vpop.f32.mrf.mxu0
      %1175 = vmatprep.mubr.bf16.mxu0 0
      %1176 = vmatmul.mubr.bf16.gmra.mxu0 %v1058
      %v1177 = vpop.f32.mrf.mxu0
      %v1178 = vadd.f32 0.0, %v1177
      %v1179 = vpop.f32.mrf.mxu0
      %v1180 = vpop.f32.mrf.mxu0
      %v1181 = vadd.f32 0.0, %v1180
      %v1182 = vpop.f32.mrf.mxu0
      %1183 = vmatprep.mubr.bf16.mxu0 0
      %1184 = vmatmul.mubr.bf16.gmra.mxu0 %v1061
      %v1185 = vpop.f32.mrf.mxu0
      %v1186 = vadd.f32 0.0, %v1185
      %v1187 = vpop.f32.mrf.mxu0
      %v1188 = vpop.f32.mrf.mxu0
      %v1189 = vadd.f32 0.0, %v1188
      %v1190 = vpop.f32.mrf.mxu0
      %1191 = vmatprep.mubr.bf16.mxu0 0
      %1192 = vmatmul.mubr.bf16.gmra.mxu0 %v1064
      %v1193 = vpop.f32.mrf.mxu0
      %v1194 = vadd.f32 0.0, %v1193
      %v1195 = vpop.f32.mrf.mxu0
      %v1196 = vpop.f32.mrf.mxu0
      %v1197 = vadd.f32 0.0, %v1196
      %v1198 = vpop.f32.mrf.mxu0
      %1199 = vmatprep.mubr.bf16.mxu0 0
      %1200 = vmatmul.mubr.bf16.gmra.mxu0 %v1067
      %v1201 = vpop.f32.mrf.mxu0
      %v1202 = vadd.f32 0.0, %v1201
      %v1203 = vpop.f32.mrf.mxu0
      %v1204 = vpop.f32.mrf.mxu0
      %v1205 = vadd.f32 0.0, %v1204
      %v1206 = vpop.f32.mrf.mxu0
      %1207 = vmatprep.mubr.bf16.mxu0 0
      %1208 = vmatmul.mubr.bf16.gmra.mxu0 %v1070
      %v1209 = vpop.f32.mrf.mxu0
      %v1210 = vadd.f32 0.0, %v1209
      %v1211 = vpop.f32.mrf.mxu0
      %v1212 = vpop.f32.mrf.mxu0
      %v1213 = vadd.f32 0.0, %v1212
      %v1214 = vpop.f32.mrf.mxu0
      %1215 = vmatprep.mubr.bf16.mxu0 0
      %1216 = vmatmul.mubr.bf16.gmra.mxu0 %v1073
      %v1217 = vpop.f32.mrf.mxu0
      %v1218 = vadd.f32 0.0, %v1217
      %v1219 = vpop.f32.mrf.mxu0
      %v1220 = vpop.f32.mrf.mxu0
      %v1221 = vadd.f32 0.0, %v1220
      %v1222 = vpop.f32.mrf.mxu0
      %1223 = vmatprep.mubr.bf16.mxu0 0
      %1224 = vmatmul.mubr.bf16.gmra.mxu0 %v1076
      %v1225 = vpop.f32.mrf.mxu0
      %v1226 = vadd.f32 0.0, %v1225
      %v1227 = vpop.f32.mrf.mxu0
      %v1228 = vpop.f32.mrf.mxu0
      %v1229 = vadd.f32 0.0, %v1228
      %v1230 = vpop.f32.mrf.mxu0
      %1231 = vmatprep.mubr.bf16.mxu0 0
      %1232 = vmatmul.mubr.bf16.gmra.mxu0 %v1079
      %v1233 = vpop.f32.mrf.mxu0
      %v1234 = vadd.f32 0.0, %v1233
      %v1235 = vpop.f32.mrf.mxu0
      %v1236 = vpop.f32.mrf.mxu0
      %v1237 = vadd.f32 0.0, %v1236
      %v1238 = vpop.f32.mrf.mxu0
      %1239 = vmatprep.mubr.bf16.mxu0 0
      %1240 = vmatmul.mubr.bf16.gmra.mxu0 %v1082
      %v1241 = vpop.f32.mrf.mxu0
      %v1242 = vadd.f32 0.0, %v1241
      %v1243 = vpop.f32.mrf.mxu0
      %v1244 = vpop.f32.mrf.mxu0
      %v1245 = vadd.f32 0.0, %v1244
      %v1246 = vpop.f32.mrf.mxu0
      %1247 = vdwg.mxu0
      %v1248 = vadd.f32 %v567, %v1122
      %v1249 = vadd.f32 %v568, %v1125
      %v1250 = vadd.f32 %v569, %v1130
      %v1251 = vadd.f32 %v570, %v1133
      %v1252 = vadd.f32 %v571, %v1138
      %v1253 = vadd.f32 %v572, %v1141
      %v1254 = vadd.f32 %v573, %v1146
      %v1255 = vadd.f32 %v574, %v1149
      %v1256 = vadd.f32 %v575, %v1154
      %v1257 = vadd.f32 %v576, %v1157
      %v1258 = vadd.f32 %v577, %v1162
      %v1259 = vadd.f32 %v578, %v1165
      %v1260 = vadd.f32 %v579, %v1170
      %v1261 = vadd.f32 %v580, %v1173
      %v1262 = vadd.f32 %v581, %v1178
      %v1263 = vadd.f32 %v582, %v1181
      %v1264 = vadd.f32 %v583, %v1186
      %v1265 = vadd.f32 %v584, %v1189
      %v1266 = vadd.f32 %v585, %v1194
      %v1267 = vadd.f32 %v586, %v1197
      %v1268 = vadd.f32 %v587, %v1202
      %v1269 = vadd.f32 %v588, %v1205
      %v1270 = vadd.f32 %v589, %v1210
      %v1271 = vadd.f32 %v590, %v1213
      %v1272 = vadd.f32 %v591, %v1218
      %v1273 = vadd.f32 %v592, %v1221
      %v1274 = vadd.f32 %v593, %v1226
      %v1275 = vadd.f32 %v594, %v1229
      %v1276 = vadd.f32 %v595, %v1234
      %v1277 = vadd.f32 %v596, %v1237
      %v1278 = vadd.f32 %v597, %v1242
      %v1279 = vadd.f32 %v598, %v1245
      %vm1296 = vcmask 1042432
      %vm1297 = vcmask 1046532
      %vm1298 = vmor %vm1296, %vm1297
      %v1299 = vrot.slane %v211, 5
      %v1300 = vrot.slane %v1299, 4
      %v1301 = vrot.slane %v212, 5
      %v1302 = vsel %vm1298, %v1300, %v1301
      %v1303 = vrot.slane %v1301, 4
      %v1304 = vrot.slane %v213, 5
      %v1305 = vsel %vm1298, %v1303, %v1304
      %v1306 = vrot.slane %v214, 5
      %v1307 = vrot.slane %v1306, 4
      %v1308 = vrot.slane %v215, 5
      %v1309 = vsel %vm1298, %v1307, %v1308
      %v1310 = vrot.slane %v1308, 4
      %v1311 = vrot.slane %v216, 5
      %v1312 = vsel %vm1298, %v1310, %v1311
      %v1313 = vrot.slane %v217, 5
      %v1314 = vrot.slane %v1313, 4
      %v1315 = vrot.slane %v218, 5
      %v1316 = vsel %vm1298, %v1314, %v1315
      %v1317 = vrot.slane %v1315, 4
      %v1318 = vrot.slane %v219, 5
      %v1319 = vsel %vm1298, %v1317, %v1318
      %v1320 = vrot.slane %v220, 5
      %v1321 = vrot.slane %v1320, 4
      %v1322 = vrot.slane %v221, 5
      %v1323 = vsel %vm1298, %v1321, %v1322
      %v1324 = vrot.slane %v1322, 4
      %v1325 = vrot.slane %v222, 5
      %v1326 = vsel %vm1298, %v1324, %v1325
      %v1327 = vrot.slane %v223, 5
      %v1328 = vrot.slane %v1327, 4
      %v1329 = vrot.slane %v224, 5
      %v1330 = vsel %vm1298, %v1328, %v1329
      %v1331 = vrot.slane %v1329, 4
      %v1332 = vrot.slane %v225, 5
      %v1333 = vsel %vm1298, %v1331, %v1332
      %v1334 = vrot.slane %v226, 5
      %v1335 = vrot.slane %v1334, 4
      %v1336 = vrot.slane %v227, 5
      %v1337 = vsel %vm1298, %v1335, %v1336
      %v1338 = vrot.slane %v1336, 4
      %v1339 = vrot.slane %v228, 5
      %v1340 = vsel %vm1298, %v1338, %v1339
      %v1341 = vrot.slane %v229, 5
      %v1342 = vrot.slane %v1341, 4
      %v1343 = vrot.slane %v230, 5
      %v1344 = vsel %vm1298, %v1342, %v1343
      %v1345 = vrot.slane %v1343, 4
      %v1346 = vrot.slane %v231, 5
      %v1347 = vsel %vm1298, %v1345, %v1346
      %v1348 = vrot.slane %v232, 5
      %v1349 = vrot.slane %v1348, 4
      %v1350 = vrot.slane %v233, 5
      %v1351 = vsel %vm1298, %v1349, %v1350
      %v1352 = vrot.slane %v1350, 4
      %v1353 = vrot.slane %v234, 5
      %v1354 = vsel %vm1298, %v1352, %v1353
      %v1355 = vrot.slane %v235, 5
      %v1356 = vrot.slane %v1355, 4
      %v1357 = vrot.slane %v236, 5
      %v1358 = vsel %vm1298, %v1356, %v1357
      %v1359 = vrot.slane %v1357, 4
      %v1360 = vrot.slane %v237, 5
      %v1361 = vsel %vm1298, %v1359, %v1360
      %v1362 = vrot.slane %v238, 5
      %v1363 = vrot.slane %v1362, 4
      %v1364 = vrot.slane %v239, 5
      %v1365 = vsel %vm1298, %v1363, %v1364
      %v1366 = vrot.slane %v1364, 4
      %v1367 = vrot.slane %v240, 5
      %v1368 = vsel %vm1298, %v1366, %v1367
      %v1369 = vrot.slane %v241, 5
      %v1370 = vrot.slane %v1369, 4
      %v1371 = vrot.slane %v242, 5
      %v1372 = vsel %vm1298, %v1370, %v1371
      %v1373 = vrot.slane %v1371, 4
      %v1374 = vrot.slane %v243, 5
      %v1375 = vsel %vm1298, %v1373, %v1374
      %v1376 = vrot.slane %v244, 5
      %v1377 = vrot.slane %v1376, 4
      %v1378 = vrot.slane %v245, 5
      %v1379 = vsel %vm1298, %v1377, %v1378
      %v1380 = vrot.slane %v1378, 4
      %v1381 = vrot.slane %v246, 5
      %v1382 = vsel %vm1298, %v1380, %v1381
      %v1383 = vrot.slane %v247, 5
      %v1384 = vrot.slane %v1383, 4
      %v1385 = vrot.slane %v248, 5
      %v1386 = vsel %vm1298, %v1384, %v1385
      %v1387 = vrot.slane %v1385, 4
      %v1388 = vrot.slane %v249, 5
      %v1389 = vsel %vm1298, %v1387, %v1388
      %v1390 = vrot.slane %v250, 5
      %v1391 = vrot.slane %v1390, 4
      %v1392 = vrot.slane %v251, 5
      %v1393 = vsel %vm1298, %v1391, %v1392
      %v1394 = vrot.slane %v1392, 4
      %v1395 = vrot.slane %v252, 5
      %v1396 = vsel %vm1298, %v1394, %v1395
      %v1397 = vrot.slane %v253, 5
      %v1398 = vrot.slane %v1397, 4
      %v1399 = vrot.slane %v254, 5
      %v1400 = vsel %vm1298, %v1398, %v1399
      %v1401 = vrot.slane %v1399, 4
      %v1402 = vrot.slane %v255, 5
      %v1403 = vsel %vm1298, %v1401, %v1402
      %v1404 = vrot.slane %v256, 5
      %v1405 = vrot.slane %v1404, 4
      %v1406 = vrot.slane %v257, 5
      %v1407 = vsel %vm1298, %v1405, %v1406
      %v1408 = vrot.slane %v1406, 4
      %v1409 = vrot.slane %v258, 5
      %v1410 = vsel %vm1298, %v1408, %v1409
      %s1411 = scalar_lea.vmem %s1, 4
      %v1412 = vld [vmem:[%s1411] sm:$0x3]
      %v1413 = vunpack.c.l.b16 %v1302
      %v1414 = vunpack.c.l.b16 %v1305
      %v1415 = vunpack.c.l.b16 %v1309
      %v1416 = vunpack.c.l.b16 %v1312
      %v1417 = vunpack.c.l.b16 %v1316
      %v1418 = vunpack.c.l.b16 %v1319
      %v1419 = vunpack.c.l.b16 %v1323
      %v1420 = vunpack.c.l.b16 %v1326
      %v1421 = vunpack.c.l.b16 %v1330
      %v1422 = vunpack.c.l.b16 %v1333
      %v1423 = vunpack.c.l.b16 %v1337
      %v1424 = vunpack.c.l.b16 %v1340
      %v1425 = vunpack.c.l.b16 %v1344
      %v1426 = vunpack.c.l.b16 %v1347
      %v1427 = vunpack.c.l.b16 %v1351
      %v1428 = vunpack.c.l.b16 %v1354
      %v1429 = vunpack.c.l.b16 %v1358
      %v1430 = vunpack.c.l.b16 %v1361
      %v1431 = vunpack.c.l.b16 %v1365
      %v1432 = vunpack.c.l.b16 %v1368
      %v1433 = vunpack.c.l.b16 %v1372
      %v1434 = vunpack.c.l.b16 %v1375
      %v1435 = vunpack.c.l.b16 %v1379
      %v1436 = vunpack.c.l.b16 %v1382
      %v1437 = vunpack.c.l.b16 %v1386
      %v1438 = vunpack.c.l.b16 %v1389
      %v1439 = vunpack.c.l.b16 %v1393
      %v1440 = vunpack.c.l.b16 %v1396
      %v1441 = vunpack.c.l.b16 %v1400
      %v1442 = vunpack.c.l.b16 %v1403
      %v1443 = vunpack.c.l.b16 %v1407
      %v1444 = vunpack.c.l.b16 %v1410
      %v1445 = vpack.c.b16 %v1414, %v1413
      %v1446 = vpack.c.b16 %v1416, %v1415
      %v1447 = vpack.c.b16 %v1418, %v1417
      %v1448 = vpack.c.b16 %v1420, %v1419
      %v1449 = vpack.c.b16 %v1422, %v1421
      %v1450 = vpack.c.b16 %v1424, %v1423
      %v1451 = vpack.c.b16 %v1426, %v1425
      %v1452 = vpack.c.b16 %v1428, %v1427
      %v1453 = vpack.c.b16 %v1430, %v1429
      %v1454 = vpack.c.b16 %v1432, %v1431
      %v1455 = vpack.c.b16 %v1434, %v1433
      %v1456 = vpack.c.b16 %v1436, %v1435
      %v1457 = vpack.c.b16 %v1438, %v1437
      %v1458 = vpack.c.b16 %v1440, %v1439
      %v1459 = vpack.c.b16 %v1442, %v1441
      %v1460 = vpack.c.b16 %v1444, %v1443
      %v1462 = vsel %vm353, %v1445, 0
      %v1465 = vsel %vm353, %v1446, 0
      %v1468 = vsel %vm353, %v1447, 0
      %v1471 = vsel %vm353, %v1448, 0
      %v1474 = vsel %vm353, %v1449, 0
      %v1477 = vsel %vm353, %v1450, 0
      %v1480 = vsel %vm353, %v1451, 0
      %v1483 = vsel %vm353, %v1452, 0
      %v1486 = vsel %vm353, %v1453, 0
      %v1489 = vsel %vm353, %v1454, 0
      %v1492 = vsel %vm353, %v1455, 0
      %v1495 = vsel %vm353, %v1456, 0
      %v1498 = vsel %vm353, %v1457, 0
      %v1501 = vsel %vm353, %v1458, 0
      %v1504 = vsel %vm353, %v1459, 0
      %v1507 = vsel %vm353, %v1460, 0
      %v1510 = vsel %vm402, %v1412, 0
      %1512 = vmatprep.subr.bf16.mxu0 0
      %1513 = vmatpush1.bf16.msra.mxu0 0
      %1514 = vmatprep.subr.bf16.mxu0 0
      %1515 = vmatpush1.bf16.msra.mxu0 0
      %1516 = vmatprep.subr.bf16.mxu0 0
      %1517 = vmatpush1.bf16.msra.mxu0 0
      %1518 = vmatprep.subr.bf16.mxu0 0
      %1519 = vmatpush1.bf16.msra.mxu0 0
      %1520 = vmatprep.subr.bf16.mxu0 0
      %1521 = vmatpush1.bf16.msra.mxu0 0
      %1522 = vmatprep.subr.bf16.mxu0 0
      %1523 = vmatpush1.bf16.msra.mxu0 0
      %1524 = vmatprep.subr.bf16.mxu0 0
      %1525 = vmatpush1.bf16.msra.mxu0 0
      %1526 = vmatprep.subr.bf16.mxu0 0
      %1527 = vmatpush1.bf16.msra.mxu0 %v1510
      %1528 = vmatprep.subr.bf16.mxu0 0
      %1529 = vmatpush2.bf16.msra.mxu0 0
      %1530 = vmatprep.subr.bf16.mxu0 0
      %1531 = vmatpush2.bf16.msra.mxu0 0
      %1532 = vmatprep.subr.bf16.mxu0 0
      %1533 = vmatpush2.bf16.msra.mxu0 0
      %1534 = vmatprep.subr.bf16.mxu0 0
      %1535 = vmatpush2.bf16.msra.mxu0 0
      %1536 = vmatprep.subr.bf16.mxu0 0
      %1537 = vmatpush2.bf16.msra.mxu0 0
      %1538 = vmatprep.subr.bf16.mxu0 0
      %1539 = vmatpush2.bf16.msra.mxu0 0
      %1540 = vmatprep.subr.bf16.mxu0 0
      %1541 = vmatpush2.bf16.msra.mxu0 0
      %1542 = vmatprep.subr.bf16.mxu0 0
      %1543 = vmatpush2.bf16.msra.mxu0 0
      %1544 = vmatprep.mubr.bf16.mxu0 0
      %1545 = vmatmul.mubr.bf16.gmra.mxu0 %v1462
      %v1546 = vpop.f32.mrf.mxu0
      %v1547 = vadd.f32 0.0, %v1546
      %v1548 = vpop.f32.mrf.mxu0
      %v1549 = vpop.f32.mrf.mxu0
      %v1550 = vadd.f32 0.0, %v1549
      %v1551 = vpop.f32.mrf.mxu0
      %1552 = vmatprep.mubr.bf16.mxu0 0
      %1553 = vmatmul.mubr.bf16.gmra.mxu0 %v1465
      %v1554 = vpop.f32.mrf.mxu0
      %v1555 = vadd.f32 0.0, %v1554
      %v1556 = vpop.f32.mrf.mxu0
      %v1557 = vpop.f32.mrf.mxu0
      %v1558 = vadd.f32 0.0, %v1557
      %v1559 = vpop.f32.mrf.mxu0
      %1560 = vmatprep.mubr.bf16.mxu0 0
      %1561 = vmatmul.mubr.bf16.gmra.mxu0 %v1468
      %v1562 = vpop.f32.mrf.mxu0
      %v1563 = vadd.f32 0.0, %v1562
      %v1564 = vpop.f32.mrf.mxu0
      %v1565 = vpop.f32.mrf.mxu0
      %v1566 = vadd.f32 0.0, %v1565
      %v1567 = vpop.f32.mrf.mxu0
      %1568 = vmatprep.mubr.bf16.mxu0 0
      %1569 = vmatmul.mubr.bf16.gmra.mxu0 %v1471
      %v1570 = vpop.f32.mrf.mxu0
      %v1571 = vadd.f32 0.0, %v1570
      %v1572 = vpop.f32.mrf.mxu0
      %v1573 = vpop.f32.mrf.mxu0
      %v1574 = vadd.f32 0.0, %v1573
      %v1575 = vpop.f32.mrf.mxu0
      %1576 = vmatprep.mubr.bf16.mxu0 0
      %1577 = vmatmul.mubr.bf16.gmra.mxu0 %v1474
      %v1578 = vpop.f32.mrf.mxu0
      %v1579 = vadd.f32 0.0, %v1578
      %v1580 = vpop.f32.mrf.mxu0
      %v1581 = vpop.f32.mrf.mxu0
      %v1582 = vadd.f32 0.0, %v1581
      %v1583 = vpop.f32.mrf.mxu0
      %1584 = vmatprep.mubr.bf16.mxu0 0
      %1585 = vmatmul.mubr.bf16.gmra.mxu0 %v1477
      %v1586 = vpop.f32.mrf.mxu0
      %v1587 = vadd.f32 0.0, %v1586
      %v1588 = vpop.f32.mrf.mxu0
      %v1589 = vpop.f32.mrf.mxu0
      %v1590 = vadd.f32 0.0, %v1589
      %v1591 = vpop.f32.mrf.mxu0
      %1592 = vmatprep.mubr.bf16.mxu0 0
      %1593 = vmatmul.mubr.bf16.gmra.mxu0 %v1480
      %v1594 = vpop.f32.mrf.mxu0
      %v1595 = vadd.f32 0.0, %v1594
      %v1596 = vpop.f32.mrf.mxu0
      %v1597 = vpop.f32.mrf.mxu0
      %v1598 = vadd.f32 0.0, %v1597
      %v1599 = vpop.f32.mrf.mxu0
      %1600 = vmatprep.mubr.bf16.mxu0 0
      %1601 = vmatmul.mubr.bf16.gmra.mxu0 %v1483
      %v1602 = vpop.f32.mrf.mxu0
      %v1603 = vadd.f32 0.0, %v1602
      %v1604 = vpop.f32.mrf.mxu0
      %v1605 = vpop.f32.mrf.mxu0
      %v1606 = vadd.f32 0.0, %v1605
      %v1607 = vpop.f32.mrf.mxu0
      %1608 = vmatprep.mubr.bf16.mxu0 0
      %1609 = vmatmul.mubr.bf16.gmra.mxu0 %v1486
      %v1610 = vpop.f32.mrf.mxu0
      %v1611 = vadd.f32 0.0, %v1610
      %v1612 = vpop.f32.mrf.mxu0
      %v1613 = vpop.f32.mrf.mxu0
      %v1614 = vadd.f32 0.0, %v1613
      %v1615 = vpop.f32.mrf.mxu0
      %1616 = vmatprep.mubr.bf16.mxu0 0
      %1617 = vmatmul.mubr.bf16.gmra.mxu0 %v1489
      %v1618 = vpop.f32.mrf.mxu0
      %v1619 = vadd.f32 0.0, %v1618
      %v1620 = vpop.f32.mrf.mxu0
      %v1621 = vpop.f32.mrf.mxu0
      %v1622 = vadd.f32 0.0, %v1621
      %v1623 = vpop.f32.mrf.mxu0
      %1624 = vmatprep.mubr.bf16.mxu0 0
      %1625 = vmatmul.mubr.bf16.gmra.mxu0 %v1492
      %v1626 = vpop.f32.mrf.mxu0
      %v1627 = vadd.f32 0.0, %v1626
      %v1628 = vpop.f32.mrf.mxu0
      %v1629 = vpop.f32.mrf.mxu0
      %v1630 = vadd.f32 0.0, %v1629
      %v1631 = vpop.f32.mrf.mxu0
      %1632 = vmatprep.mubr.bf16.mxu0 0
      %1633 = vmatmul.mubr.bf16.gmra.mxu0 %v1495
      %v1634 = vpop.f32.mrf.mxu0
      %v1635 = vadd.f32 0.0, %v1634
      %v1636 = vpop.f32.mrf.mxu0
      %v1637 = vpop.f32.mrf.mxu0
      %v1638 = vadd.f32 0.0, %v1637
      %v1639 = vpop.f32.mrf.mxu0
      %1640 = vmatprep.mubr.bf16.mxu0 0
      %1641 = vmatmul.mubr.bf16.gmra.mxu0 %v1498
      %v1642 = vpop.f32.mrf.mxu0
      %v1643 = vadd.f32 0.0, %v1642
      %v1644 = vpop.f32.mrf.mxu0
      %v1645 = vpop.f32.mrf.mxu0
      %v1646 = vadd.f32 0.0, %v1645
      %v1647 = vpop.f32.mrf.mxu0
      %1648 = vmatprep.mubr.bf16.mxu0 0
      %1649 = vmatmul.mubr.bf16.gmra.mxu0 %v1501
      %v1650 = vpop.f32.mrf.mxu0
      %v1651 = vadd.f32 0.0, %v1650
      %v1652 = vpop.f32.mrf.mxu0
      %v1653 = vpop.f32.mrf.mxu0
      %v1654 = vadd.f32 0.0, %v1653
      %v1655 = vpop.f32.mrf.mxu0
      %1656 = vmatprep.mubr.bf16.mxu0 0
      %1657 = vmatmul.mubr.bf16.gmra.mxu0 %v1504
      %v1658 = vpop.f32.mrf.mxu0
      %v1659 = vadd.f32 0.0, %v1658
      %v1660 = vpop.f32.mrf.mxu0
      %v1661 = vpop.f32.mrf.mxu0
      %v1662 = vadd.f32 0.0, %v1661
      %v1663 = vpop.f32.mrf.mxu0
      %1664 = vmatprep.mubr.bf16.mxu0 0
      %1665 = vmatmul.mubr.bf16.gmra.mxu0 %v1507
      %v1666 = vpop.f32.mrf.mxu0
      %v1667 = vadd.f32 0.0, %v1666
      %v1668 = vpop.f32.mrf.mxu0
      %v1669 = vpop.f32.mrf.mxu0
      %v1670 = vadd.f32 0.0, %v1669
      %v1671 = vpop.f32.mrf.mxu0
      %1672 = vdwg.mxu0
      %v1673 = vadd.f32 %v1248, %v1547
      %v1674 = vadd.f32 %v1249, %v1550
      %v1675 = vadd.f32 %v1250, %v1555
      %v1676 = vadd.f32 %v1251, %v1558
      %v1677 = vadd.f32 %v1252, %v1563
      %v1678 = vadd.f32 %v1253, %v1566
      %v1679 = vadd.f32 %v1254, %v1571
      %v1680 = vadd.f32 %v1255, %v1574
      %v1681 = vadd.f32 %v1256, %v1579
      %v1682 = vadd.f32 %v1257, %v1582
      %v1683 = vadd.f32 %v1258, %v1587
      %v1684 = vadd.f32 %v1259, %v1590
      %v1685 = vadd.f32 %v1260, %v1595
      %v1686 = vadd.f32 %v1261, %v1598
      %v1687 = vadd.f32 %v1262, %v1603
      %v1688 = vadd.f32 %v1263, %v1606
      %v1689 = vadd.f32 %v1264, %v1611
      %v1690 = vadd.f32 %v1265, %v1614
      %v1691 = vadd.f32 %v1266, %v1619
      %v1692 = vadd.f32 %v1267, %v1622
      %v1693 = vadd.f32 %v1268, %v1627
      %v1694 = vadd.f32 %v1269, %v1630
      %v1695 = vadd.f32 %v1270, %v1635
      %v1696 = vadd.f32 %v1271, %v1638
      %v1697 = vadd.f32 %v1272, %v1643
      %v1698 = vadd.f32 %v1273, %v1646
      %v1699 = vadd.f32 %v1274, %v1651
      %v1700 = vadd.f32 %v1275, %v1654
      %v1701 = vadd.f32 %v1276, %v1659
      %v1702 = vadd.f32 %v1277, %v1662
      %v1703 = vadd.f32 %v1278, %v1667
      %v1704 = vadd.f32 %v1279, %v1670
      %s1705 = scalar_lea.vmem %s1, 6
      %v1706 = vld [vmem:[%s1705] sm:$0x3]
      %v1709 = vunpack.c.l.b16 %v259
      %v1710 = vunpack.c.l.b16 %v260
      %v1711 = vpack.c.b16 %v1710, %v1709
      %v1713 = vsel %vm353, %v1711, 0
      %v1716 = vsel %vm402, %v1706, 0
      %1718 = vmatprep.subr.bf16.mxu0 0
      %1719 = vmatpush1.bf16.msra.mxu0 0
      %1720 = vmatprep.subr.bf16.mxu0 0
      %1721 = vmatpush1.bf16.msra.mxu0 0
      %1722 = vmatprep.subr.bf16.mxu0 0
      %1723 = vmatpush1.bf16.msra.mxu0 0
      %1724 = vmatprep.subr.bf16.mxu0 0
      %1725 = vmatpush1.bf16.msra.mxu0 0
      %1726 = vmatprep.subr.bf16.mxu0 0
      %1727 = vmatpush1.bf16.msra.mxu0 0
      %1728 = vmatprep.subr.bf16.mxu0 0
      %1729 = vmatpush1.bf16.msra.mxu0 0
      %1730 = vmatprep.subr.bf16.mxu0 0
      %1731 = vmatpush1.bf16.msra.mxu0 0
      %1732 = vmatprep.subr.bf16.mxu0 0
      %1733 = vmatpush1.bf16.msra.mxu0 %v1716
      %1734 = vmatprep.subr.bf16.mxu0 0
      %1735 = vmatpush2.bf16.msra.mxu0 0
      %1736 = vmatprep.subr.bf16.mxu0 0
      %1737 = vmatpush2.bf16.msra.mxu0 0
      %1738 = vmatprep.subr.bf16.mxu0 0
      %1739 = vmatpush2.bf16.msra.mxu0 0
      %1740 = vmatprep.subr.bf16.mxu0 0
      %1741 = vmatpush2.bf16.msra.mxu0 0
      %1742 = vmatprep.subr.bf16.mxu0 0
      %1743 = vmatpush2.bf16.msra.mxu0 0
      %1744 = vmatprep.subr.bf16.mxu0 0
      %1745 = vmatpush2.bf16.msra.mxu0 0
      %1746 = vmatprep.subr.bf16.mxu0 0
      %1747 = vmatpush2.bf16.msra.mxu0 0
      %1748 = vmatprep.subr.bf16.mxu0 0
      %1749 = vmatpush2.bf16.msra.mxu0 0
      %1750 = vmatprep.mubr.bf16.mxu0 0
      %1751 = vmatmul.mubr.bf16.gmra.mxu0 %v358
      %v1752 = vpop.f32.mrf.mxu0
      %v1753 = vadd.f32 0.0, %v1752
      %v1754 = vpop.f32.mrf.mxu0
      %v1755 = vpop.f32.mrf.mxu0
      %v1756 = vadd.f32 0.0, %v1755
      %v1757 = vpop.f32.mrf.mxu0
      %1758 = vmatprep.mubr.bf16.mxu0 0
      %1759 = vmatmul.mubr.bf16.gmra.mxu0 %v361
      %v1760 = vpop.f32.mrf.mxu0
      %v1761 = vadd.f32 0.0, %v1760
      %v1762 = vpop.f32.mrf.mxu0
      %v1763 = vpop.f32.mrf.mxu0
      %v1764 = vadd.f32 0.0, %v1763
      %v1765 = vpop.f32.mrf.mxu0
      %1766 = vmatprep.mubr.bf16.mxu0 0
      %1767 = vmatmul.mubr.bf16.gmra.mxu0 %v364
      %v1768 = vpop.f32.mrf.mxu0
      %v1769 = vadd.f32 0.0, %v1768
      %v1770 = vpop.f32.mrf.mxu0
      %v1771 = vpop.f32.mrf.mxu0
      %v1772 = vadd.f32 0.0, %v1771
      %v1773 = vpop.f32.mrf.mxu0
      %1774 = vmatprep.mubr.bf16.mxu0 0
      %1775 = vmatmul.mubr.bf16.gmra.mxu0 %v367
      %v1776 = vpop.f32.mrf.mxu0
      %v1777 = vadd.f32 0.0, %v1776
      %v1778 = vpop.f32.mrf.mxu0
      %v1779 = vpop.f32.mrf.mxu0
      %v1780 = vadd.f32 0.0, %v1779
      %v1781 = vpop.f32.mrf.mxu0
      %1782 = vmatprep.mubr.bf16.mxu0 0
      %1783 = vmatmul.mubr.bf16.gmra.mxu0 %v370
      %v1784 = vpop.f32.mrf.mxu0
      %v1785 = vadd.f32 0.0, %v1784
      %v1786 = vpop.f32.mrf.mxu0
      %v1787 = vpop.f32.mrf.mxu0
      %v1788 = vadd.f32 0.0, %v1787
      %v1789 = vpop.f32.mrf.mxu0
      %1790 = vmatprep.mubr.bf16.mxu0 0
      %1791 = vmatmul.mubr.bf16.gmra.mxu0 %v373
      %v1792 = vpop.f32.mrf.mxu0
      %v1793 = vadd.f32 0.0, %v1792
      %v1794 = vpop.f32.mrf.mxu0
      %v1795 = vpop.f32.mrf.mxu0
      %v1796 = vadd.f32 0.0, %v1795
      %v1797 = vpop.f32.mrf.mxu0
      %1798 = vmatprep.mubr.bf16.mxu0 0
      %1799 = vmatmul.mubr.bf16.gmra.mxu0 %v376
      %v1800 = vpop.f32.mrf.mxu0
      %v1801 = vadd.f32 0.0, %v1800
      %v1802 = vpop.f32.mrf.mxu0
      %v1803 = vpop.f32.mrf.mxu0
      %v1804 = vadd.f32 0.0, %v1803
      %v1805 = vpop.f32.mrf.mxu0
      %1806 = vmatprep.mubr.bf16.mxu0 0
      %1807 = vmatmul.mubr.bf16.gmra.mxu0 %v379
      %v1808 = vpop.f32.mrf.mxu0
      %v1809 = vadd.f32 0.0, %v1808
      %v1810 = vpop.f32.mrf.mxu0
      %v1811 = vpop.f32.mrf.mxu0
      %v1812 = vadd.f32 0.0, %v1811
      %v1813 = vpop.f32.mrf.mxu0
      %1814 = vmatprep.mubr.bf16.mxu0 0
      %1815 = vmatmul.mubr.bf16.gmra.mxu0 %v382
      %v1816 = vpop.f32.mrf.mxu0
      %v1817 = vadd.f32 0.0, %v1816
      %v1818 = vpop.f32.mrf.mxu0
      %v1819 = vpop.f32.mrf.mxu0
      %v1820 = vadd.f32 0.0, %v1819
      %v1821 = vpop.f32.mrf.mxu0
      %1822 = vmatprep.mubr.bf16.mxu0 0
      %1823 = vmatmul.mubr.bf16.gmra.mxu0 %v385
      %v1824 = vpop.f32.mrf.mxu0
      %v1825 = vadd.f32 0.0, %v1824
      %v1826 = vpop.f32.mrf.mxu0
      %v1827 = vpop.f32.mrf.mxu0
      %v1828 = vadd.f32 0.0, %v1827
      %v1829 = vpop.f32.mrf.mxu0
      %1830 = vmatprep.mubr.bf16.mxu0 0
      %1831 = vmatmul.mubr.bf16.gmra.mxu0 %v388
      %v1832 = vpop.f32.mrf.mxu0
      %v1833 = vadd.f32 0.0, %v1832
      %v1834 = vpop.f32.mrf.mxu0
      %v1835 = vpop.f32.mrf.mxu0
      %v1836 = vadd.f32 0.0, %v1835
      %v1837 = vpop.f32.mrf.mxu0
      %1838 = vmatprep.mubr.bf16.mxu0 0
      %1839 = vmatmul.mubr.bf16.gmra.mxu0 %v391
      %v1840 = vpop.f32.mrf.mxu0
      %v1841 = vadd.f32 0.0, %v1840
      %v1842 = vpop.f32.mrf.mxu0
      %v1843 = vpop.f32.mrf.mxu0
      %v1844 = vadd.f32 0.0, %v1843
      %v1845 = vpop.f32.mrf.mxu0
      %1846 = vmatprep.mubr.bf16.mxu0 0
      %1847 = vmatmul.mubr.bf16.gmra.mxu0 %v394
      %v1848 = vpop.f32.mrf.mxu0
      %v1849 = vadd.f32 0.0, %v1848
      %v1850 = vpop.f32.mrf.mxu0
      %v1851 = vpop.f32.mrf.mxu0
      %v1852 = vadd.f32 0.0, %v1851
      %v1853 = vpop.f32.mrf.mxu0
      %1854 = vmatprep.mubr.bf16.mxu0 0
      %1855 = vmatmul.mubr.bf16.gmra.mxu0 %v397
      %v1856 = vpop.f32.mrf.mxu0
      %v1857 = vadd.f32 0.0, %v1856
      %v1858 = vpop.f32.mrf.mxu0
      %v1859 = vpop.f32.mrf.mxu0
      %v1860 = vadd.f32 0.0, %v1859
      %v1861 = vpop.f32.mrf.mxu0
      %1862 = vmatprep.mubr.bf16.mxu0 0
      %1863 = vmatmul.mubr.bf16.gmra.mxu0 %v400
      %v1864 = vpop.f32.mrf.mxu0
      %v1865 = vadd.f32 0.0, %v1864
      %v1866 = vpop.f32.mrf.mxu0
      %v1867 = vpop.f32.mrf.mxu0
      %v1868 = vadd.f32 0.0, %v1867
      %v1869 = vpop.f32.mrf.mxu0
      %1870 = vmatprep.mubr.bf16.mxu0 0
      %1871 = vmatmul.mubr.bf16.gmra.mxu0 %v1713
      %v1872 = vpop.f32.mrf.mxu0
      %v1873 = vadd.f32 0.0, %v1872
      %v1874 = vpop.f32.mrf.mxu0
      %v1875 = vpop.f32.mrf.mxu0
      %v1876 = vadd.f32 0.0, %v1875
      %v1877 = vpop.f32.mrf.mxu0
      %1878 = vdwg.mxu0
      %v1879 = vadd.f32 %v1673, %v1753
      %v1880 = vadd.f32 %v1674, %v1756
      %v1881 = vadd.f32 %v1675, %v1761
      %v1882 = vadd.f32 %v1676, %v1764
      %v1883 = vadd.f32 %v1677, %v1769
      %v1884 = vadd.f32 %v1678, %v1772
      %v1885 = vadd.f32 %v1679, %v1777
      %v1886 = vadd.f32 %v1680, %v1780
      %v1887 = vadd.f32 %v1681, %v1785
      %v1888 = vadd.f32 %v1682, %v1788
      %v1889 = vadd.f32 %v1683, %v1793
      %v1890 = vadd.f32 %v1684, %v1796
      %v1891 = vadd.f32 %v1685, %v1801
      %v1892 = vadd.f32 %v1686, %v1804
      %v1893 = vadd.f32 %v1687, %v1809
      %v1894 = vadd.f32 %v1688, %v1812
      %v1895 = vadd.f32 %v1689, %v1817
      %v1896 = vadd.f32 %v1690, %v1820
      %v1897 = vadd.f32 %v1691, %v1825
      %v1898 = vadd.f32 %v1692, %v1828
      %v1899 = vadd.f32 %v1693, %v1833
      %v1900 = vadd.f32 %v1694, %v1836
      %v1901 = vadd.f32 %v1695, %v1841
      %v1902 = vadd.f32 %v1696, %v1844
      %v1903 = vadd.f32 %v1697, %v1849
      %v1904 = vadd.f32 %v1698, %v1852
      %v1905 = vadd.f32 %v1699, %v1857
      %v1906 = vadd.f32 %v1700, %v1860
      %v1907 = vadd.f32 %v1701, %v1865
      %v1908 = vadd.f32 %v1702, %v1868
      %v1909 = vadd.f32 %v1703, %v1873
      %v1910 = vadd.f32 %v1704, %v1876
      %v1912 = vshrl.u32 %v259, 16
      %v1914 = vrot.slane %v1912, 4
      %v1915 = vshll.u32 %v259, 16
      %v1917 = vrot.slane %v1915, 5
      %v1918 = vor.u32 %v1914, %v1917
      %v1919 = vrot.slane %v1918, 4
      %v1921 = vshll.u32 %v260, 16
      %v1923 = vrot.slane %v1921, 5
      %v1924 = vsel %vm601, %v1919, %v1923
      %v1925 = vshrl.u32 %v260, 16
      %v1927 = vrot.slane %v1925, 4
      %v1928 = vor.u32 %v1927, %v1923
      %v1929 = vrot.slane %v1928, 4
      %v1931 = vshll.u32 %v261, 16
      %v1933 = vrot.slane %v1931, 5
      %v1934 = vsel %vm601, %v1929, %v1933
      %s1935 = scalar_lea.vmem %s1, 8
      %v1936 = vld [vmem:[%s1935] sm:$0x3]
      %v1937 = vunpack.c.l.b16 %v1924
      %v1938 = vunpack.c.l.b16 %v1934
      %v1939 = vpack.c.b16 %v1938, %v1937
      %v1941 = vsel %vm353, %v1939, 0
      %v1944 = vsel %vm402, %v1936, 0
      %1946 = vmatprep.subr.bf16.mxu0 0
      %1947 = vmatpush1.bf16.msra.mxu0 0
      %1948 = vmatprep.subr.bf16.mxu0 0
      %1949 = vmatpush1.bf16.msra.mxu0 0
      %1950 = vmatprep.subr.bf16.mxu0 0
      %1951 = vmatpush1.bf16.msra.mxu0 0
      %1952 = vmatprep.subr.bf16.mxu0 0
      %1953 = vmatpush1.bf16.msra.mxu0 0
      %1954 = vmatprep.subr.bf16.mxu0 0
      %1955 = vmatpush1.bf16.msra.mxu0 0
      %1956 = vmatprep.subr.bf16.mxu0 0
      %1957 = vmatpush1.bf16.msra.mxu0 0
      %1958 = vmatprep.subr.bf16.mxu0 0
      %1959 = vmatpush1.bf16.msra.mxu0 0
      %1960 = vmatprep.subr.bf16.mxu0 0
      %1961 = vmatpush1.bf16.msra.mxu0 %v1944
      %1962 = vmatprep.subr.bf16.mxu0 0
      %1963 = vmatpush2.bf16.msra.mxu0 0
      %1964 = vmatprep.subr.bf16.mxu0 0
      %1965 = vmatpush2.bf16.msra.mxu0 0
      %1966 = vmatprep.subr.bf16.mxu0 0
      %1967 = vmatpush2.bf16.msra.mxu0 0
      %1968 = vmatprep.subr.bf16.mxu0 0
      %1969 = vmatpush2.bf16.msra.mxu0 0
      %1970 = vmatprep.subr.bf16.mxu0 0
      %1971 = vmatpush2.bf16.msra.mxu0 0
      %1972 = vmatprep.subr.bf16.mxu0 0
      %1973 = vmatpush2.bf16.msra.mxu0 0
      %1974 = vmatprep.subr.bf16.mxu0 0
      %1975 = vmatpush2.bf16.msra.mxu0 0
      %1976 = vmatprep.subr.bf16.mxu0 0
      %1977 = vmatpush2.bf16.msra.mxu0 0
      %1978 = vmatprep.mubr.bf16.mxu0 0
      %1979 = vmatmul.mubr.bf16.gmra.mxu0 %v1040
      %v1980 = vpop.f32.mrf.mxu0
      %v1981 = vadd.f32 0.0, %v1980
      %v1982 = vpop.f32.mrf.mxu0
      %v1983 = vpop.f32.mrf.mxu0
      %v1984 = vadd.f32 0.0, %v1983
      %v1985 = vpop.f32.mrf.mxu0
      %1986 = vmatprep.mubr.bf16.mxu0 0
      %1987 = vmatmul.mubr.bf16.gmra.mxu0 %v1043
      %v1988 = vpop.f32.mrf.mxu0
      %v1989 = vadd.f32 0.0, %v1988
      %v1990 = vpop.f32.mrf.mxu0
      %v1991 = vpop.f32.mrf.mxu0
      %v1992 = vadd.f32 0.0, %v1991
      %v1993 = vpop.f32.mrf.mxu0
      %1994 = vmatprep.mubr.bf16.mxu0 0
      %1995 = vmatmul.mubr.bf16.gmra.mxu0 %v1046
      %v1996 = vpop.f32.mrf.mxu0
      %v1997 = vadd.f32 0.0, %v1996
      %v1998 = vpop.f32.mrf.mxu0
      %v1999 = vpop.f32.mrf.mxu0
      %v2000 = vadd.f32 0.0, %v1999
      %v2001 = vpop.f32.mrf.mxu0
      %2002 = vmatprep.mubr.bf16.mxu0 0
      %2003 = vmatmul.mubr.bf16.gmra.mxu0 %v1049
      %v2004 = vpop.f32.mrf.mxu0
      %v2005 = vadd.f32 0.0, %v2004
      %v2006 = vpop.f32.mrf.mxu0
      %v2007 = vpop.f32.mrf.mxu0
      %v2008 = vadd.f32 0.0, %v2007
      %v2009 = vpop.f32.mrf.mxu0
      %2010 = vmatprep.mubr.bf16.mxu0 0
      %2011 = vmatmul.mubr.bf16.gmra.mxu0 %v1052
      %v2012 = vpop.f32.mrf.mxu0
      %v2013 = vadd.f32 0.0, %v2012
      %v2014 = vpop.f32.mrf.mxu0
      %v2015 = vpop.f32.mrf.mxu0
      %v2016 = vadd.f32 0.0, %v2015
      %v2017 = vpop.f32.mrf.mxu0
      %2018 = vmatprep.mubr.bf16.mxu0 0
      %2019 = vmatmul.mubr.bf16.gmra.mxu0 %v1055
      %v2020 = vpop.f32.mrf.mxu0
      %v2021 = vadd.f32 0.0, %v2020
      %v2022 = vpop.f32.mrf.mxu0
      %v2023 = vpop.f32.mrf.mxu0
      %v2024 = vadd.f32 0.0, %v2023
      %v2025 = vpop.f32.mrf.mxu0
      %2026 = vmatprep.mubr.bf16.mxu0 0
      %2027 = vmatmul.mubr.bf16.gmra.mxu0 %v1058
      %v2028 = vpop.f32.mrf.mxu0
      %v2029 = vadd.f32 0.0, %v2028
      %v2030 = vpop.f32.mrf.mxu0
      %v2031 = vpop.f32.mrf.mxu0
      %v2032 = vadd.f32 0.0, %v2031
      %v2033 = vpop.f32.mrf.mxu0
      %2034 = vmatprep.mubr.bf16.mxu0 0
      %2035 = vmatmul.mubr.bf16.gmra.mxu0 %v1061
      %v2036 = vpop.f32.mrf.mxu0
      %v2037 = vadd.f32 0.0, %v2036
      %v2038 = vpop.f32.mrf.mxu0
      %v2039 = vpop.f32.mrf.mxu0
      %v2040 = vadd.f32 0.0, %v2039
      %v2041 = vpop.f32.mrf.mxu0
      %2042 = vmatprep.mubr.bf16.mxu0 0
      %2043 = vmatmul.mubr.bf16.gmra.mxu0 %v1064
      %v2044 = vpop.f32.mrf.mxu0
      %v2045 = vadd.f32 0.0, %v2044
      %v2046 = vpop.f32.mrf.mxu0
      %v2047 = vpop.f32.mrf.mxu0
      %v2048 = vadd.f32 0.0, %v2047
      %v2049 = vpop.f32.mrf.mxu0
      %2050 = vmatprep.mubr.bf16.mxu0 0
      %2051 = vmatmul.mubr.bf16.gmra.mxu0 %v1067
      %v2052 = vpop.f32.mrf.mxu0
      %v2053 = vadd.f32 0.0, %v2052
      %v2054 = vpop.f32.mrf.mxu0
      %v2055 = vpop.f32.mrf.mxu0
      %v2056 = vadd.f32 0.0, %v2055
      %v2057 = vpop.f32.mrf.mxu0
      %2058 = vmatprep.mubr.bf16.mxu0 0
      %2059 = vmatmul.mubr.bf16.gmra.mxu0 %v1070
      %v2060 = vpop.f32.mrf.mxu0
      %v2061 = vadd.f32 0.0, %v2060
      %v2062 = vpop.f32.mrf.mxu0
      %v2063 = vpop.f32.mrf.mxu0
      %v2064 = vadd.f32 0.0, %v2063
      %v2065 = vpop.f32.mrf.mxu0
      %2066 = vmatprep.mubr.bf16.mxu0 0
      %2067 = vmatmul.mubr.bf16.gmra.mxu0 %v1073
      %v2068 = vpop.f32.mrf.mxu0
      %v2069 = vadd.f32 0.0, %v2068
      %v2070 = vpop.f32.mrf.mxu0
      %v2071 = vpop.f32.mrf.mxu0
      %v2072 = vadd.f32 0.0, %v2071
      %v2073 = vpop.f32.mrf.mxu0
      %2074 = vmatprep.mubr.bf16.mxu0 0
      %2075 = vmatmul.mubr.bf16.gmra.mxu0 %v1076
      %v2076 = vpop.f32.mrf.mxu0
      %v2077 = vadd.f32 0.0, %v2076
      %v2078 = vpop.f32.mrf.mxu0
      %v2079 = vpop.f32.mrf.mxu0
      %v2080 = vadd.f32 0.0, %v2079
      %v2081 = vpop.f32.mrf.mxu0
      %2082 = vmatprep.mubr.bf16.mxu0 0
      %2083 = vmatmul.mubr.bf16.gmra.mxu0 %v1079
      %v2084 = vpop.f32.mrf.mxu0
      %v2085 = vadd.f32 0.0, %v2084
      %v2086 = vpop.f32.mrf.mxu0
      %v2087 = vpop.f32.mrf.mxu0
      %v2088 = vadd.f32 0.0, %v2087
      %v2089 = vpop.f32.mrf.mxu0
      %2090 = vmatprep.mubr.bf16.mxu0 0
      %2091 = vmatmul.mubr.bf16.gmra.mxu0 %v1082
      %v2092 = vpop.f32.mrf.mxu0
      %v2093 = vadd.f32 0.0, %v2092
      %v2094 = vpop.f32.mrf.mxu0
      %v2095 = vpop.f32.mrf.mxu0
      %v2096 = vadd.f32 0.0, %v2095
      %v2097 = vpop.f32.mrf.mxu0
      %2098 = vmatprep.mubr.bf16.mxu0 0
      %2099 = vmatmul.mubr.bf16.gmra.mxu0 %v1941
      %v2100 = vpop.f32.mrf.mxu0
      %v2101 = vadd.f32 0.0, %v2100
      %v2102 = vpop.f32.mrf.mxu0
      %v2103 = vpop.f32.mrf.mxu0
      %v2104 = vadd.f32 0.0, %v2103
      %v2105 = vpop.f32.mrf.mxu0
      %2106 = vdwg.mxu0
      %v2107 = vadd.f32 %v1879, %v1981
      %v2108 = vadd.f32 %v1880, %v1984
      %v2109 = vadd.f32 %v1881, %v1989
      %v2110 = vadd.f32 %v1882, %v1992
      %v2111 = vadd.f32 %v1883, %v1997
      %v2112 = vadd.f32 %v1884, %v2000
      %v2113 = vadd.f32 %v1885, %v2005
      %v2114 = vadd.f32 %v1886, %v2008
      %v2115 = vadd.f32 %v1887, %v2013
      %v2116 = vadd.f32 %v1888, %v2016
      %v2117 = vadd.f32 %v1889, %v2021
      %v2118 = vadd.f32 %v1890, %v2024
      %v2119 = vadd.f32 %v1891, %v2029
      %v2120 = vadd.f32 %v1892, %v2032
      %v2121 = vadd.f32 %v1893, %v2037
      %v2122 = vadd.f32 %v1894, %v2040
      %v2123 = vadd.f32 %v1895, %v2045
      %v2124 = vadd.f32 %v1896, %v2048
      %v2125 = vadd.f32 %v1897, %v2053
      %v2126 = vadd.f32 %v1898, %v2056
      %v2127 = vadd.f32 %v1899, %v2061
      %v2128 = vadd.f32 %v1900, %v2064
      %v2129 = vadd.f32 %v1901, %v2069
      %v2130 = vadd.f32 %v1902, %v2072
      %v2131 = vadd.f32 %v1903, %v2077
      %v2132 = vadd.f32 %v1904, %v2080
      %v2133 = vadd.f32 %v1905, %v2085
      %v2134 = vadd.f32 %v1906, %v2088
      %v2135 = vadd.f32 %v1907, %v2093
      %v2136 = vadd.f32 %v1908, %v2096
      %v2137 = vadd.f32 %v1909, %v2101
      %v2138 = vadd.f32 %v1910, %v2104
      %v2140 = vrot.slane %v259, 5
      %v2141 = vrot.slane %v2140, 4
      %v2142 = vrot.slane %v260, 5
      %v2143 = vsel %vm1298, %v2141, %v2142
      %v2144 = vrot.slane %v2142, 4
      %v2145 = vrot.slane %v261, 5
      %v2146 = vsel %vm1298, %v2144, %v2145
      %s2147 = scalar_lea.vmem %s1, 10
      %v2148 = vld [vmem:[%s2147] sm:$0x3]
      %v2149 = vunpack.c.l.b16 %v2143
      %v2150 = vunpack.c.l.b16 %v2146
      %v2151 = vpack.c.b16 %v2150, %v2149
      %v2153 = vsel %vm353, %v2151, 0
      %v2156 = vsel %vm402, %v2148, 0
      %2158 = vmatprep.subr.bf16.mxu0 0
      %2159 = vmatpush1.bf16.msra.mxu0 0
      %2160 = vmatprep.subr.bf16.mxu0 0
      %2161 = vmatpush1.bf16.msra.mxu0 0
      %2162 = vmatprep.subr.bf16.mxu0 0
      %2163 = vmatpush1.bf16.msra.mxu0 0
      %2164 = vmatprep.subr.bf16.mxu0 0
      %2165 = vmatpush1.bf16.msra.mxu0 0
      %2166 = vmatprep.subr.bf16.mxu0 0
      %2167 = vmatpush1.bf16.msra.mxu0 0
      %2168 = vmatprep.subr.bf16.mxu0 0
      %2169 = vmatpush1.bf16.msra.mxu0 0
      %2170 = vmatprep.subr.bf16.mxu0 0
      %2171 = vmatpush1.bf16.msra.mxu0 0
      %2172 = vmatprep.subr.bf16.mxu0 0
      %2173 = vmatpush1.bf16.msra.mxu0 %v2156
      %2174 = vmatprep.subr.bf16.mxu0 0
      %2175 = vmatpush2.bf16.msra.mxu0 0
      %2176 = vmatprep.subr.bf16.mxu0 0
      %2177 = vmatpush2.bf16.msra.mxu0 0
      %2178 = vmatprep.subr.bf16.mxu0 0
      %2179 = vmatpush2.bf16.msra.mxu0 0
      %2180 = vmatprep.subr.bf16.mxu0 0
      %2181 = vmatpush2.bf16.msra.mxu0 0
      %2182 = vmatprep.subr.bf16.mxu0 0
      %2183 = vmatpush2.bf16.msra.mxu0 0
      %2184 = vmatprep.subr.bf16.mxu0 0
      %2185 = vmatpush2.bf16.msra.mxu0 0
      %2186 = vmatprep.subr.bf16.mxu0 0
      %2187 = vmatpush2.bf16.msra.mxu0 0
      %2188 = vmatprep.subr.bf16.mxu0 0
      %2189 = vmatpush2.bf16.msra.mxu0 0
      %2190 = vmatprep.mubr.bf16.mxu0 0
      %2191 = vmatmul.mubr.bf16.gmra.mxu0 %v1465
      %v2192 = vpop.f32.mrf.mxu0
      %v2193 = vadd.f32 0.0, %v2192
      %v2194 = vpop.f32.mrf.mxu0
      %v2195 = vpop.f32.mrf.mxu0
      %v2196 = vadd.f32 0.0, %v2195
      %v2197 = vpop.f32.mrf.mxu0
      %2198 = vmatprep.mubr.bf16.mxu0 0
      %2199 = vmatmul.mubr.bf16.gmra.mxu0 %v1468
      %v2200 = vpop.f32.mrf.mxu0
      %v2201 = vadd.f32 0.0, %v2200
      %v2202 = vpop.f32.mrf.mxu0
      %v2203 = vpop.f32.mrf.mxu0
      %v2204 = vadd.f32 0.0, %v2203
      %v2205 = vpop.f32.mrf.mxu0
      %2206 = vmatprep.mubr.bf16.mxu0 0
      %2207 = vmatmul.mubr.bf16.gmra.mxu0 %v1471
      %v2208 = vpop.f32.mrf.mxu0
      %v2209 = vadd.f32 0.0, %v2208
      %v2210 = vpop.f32.mrf.mxu0
      %v2211 = vpop.f32.mrf.mxu0
      %v2212 = vadd.f32 0.0, %v2211
      %v2213 = vpop.f32.mrf.mxu0
      %2214 = vmatprep.mubr.bf16.mxu0 0
      %2215 = vmatmul.mubr.bf16.gmra.mxu0 %v1474
      %v2216 = vpop.f32.mrf.mxu0
      %v2217 = vadd.f32 0.0, %v2216
      %v2218 = vpop.f32.mrf.mxu0
      %v2219 = vpop.f32.mrf.mxu0
      %v2220 = vadd.f32 0.0, %v2219
      %v2221 = vpop.f32.mrf.mxu0
      %2222 = vmatprep.mubr.bf16.mxu0 0
      %2223 = vmatmul.mubr.bf16.gmra.mxu0 %v1477
      %v2224 = vpop.f32.mrf.mxu0
      %v2225 = vadd.f32 0.0, %v2224
      %v2226 = vpop.f32.mrf.mxu0
      %v2227 = vpop.f32.mrf.mxu0
      %v2228 = vadd.f32 0.0, %v2227
      %v2229 = vpop.f32.mrf.mxu0
      %2230 = vmatprep.mubr.bf16.mxu0 0
      %2231 = vmatmul.mubr.bf16.gmra.mxu0 %v1480
      %v2232 = vpop.f32.mrf.mxu0
      %v2233 = vadd.f32 0.0, %v2232
      %v2234 = vpop.f32.mrf.mxu0
      %v2235 = vpop.f32.mrf.mxu0
      %v2236 = vadd.f32 0.0, %v2235
      %v2237 = vpop.f32.mrf.mxu0
      %2238 = vmatprep.mubr.bf16.mxu0 0
      %2239 = vmatmul.mubr.bf16.gmra.mxu0 %v1483
      %v2240 = vpop.f32.mrf.mxu0
      %v2241 = vadd.f32 0.0, %v2240
      %v2242 = vpop.f32.mrf.mxu0
      %v2243 = vpop.f32.mrf.mxu0
      %v2244 = vadd.f32 0.0, %v2243
      %v2245 = vpop.f32.mrf.mxu0
      %2246 = vmatprep.mubr.bf16.mxu0 0
      %2247 = vmatmul.mubr.bf16.gmra.mxu0 %v1486
      %v2248 = vpop.f32.mrf.mxu0
      %v2249 = vadd.f32 0.0, %v2248
      %v2250 = vpop.f32.mrf.mxu0
      %v2251 = vpop.f32.mrf.mxu0
      %v2252 = vadd.f32 0.0, %v2251
      %v2253 = vpop.f32.mrf.mxu0
      %2254 = vmatprep.mubr.bf16.mxu0 0
      %2255 = vmatmul.mubr.bf16.gmra.mxu0 %v1489
      %v2256 = vpop.f32.mrf.mxu0
      %v2257 = vadd.f32 0.0, %v2256
      %v2258 = vpop.f32.mrf.mxu0
      %v2259 = vpop.f32.mrf.mxu0
      %v2260 = vadd.f32 0.0, %v2259
      %v2261 = vpop.f32.mrf.mxu0
      %2262 = vmatprep.mubr.bf16.mxu0 0
      %2263 = vmatmul.mubr.bf16.gmra.mxu0 %v1492
      %v2264 = vpop.f32.mrf.mxu0
      %v2265 = vadd.f32 0.0, %v2264
      %v2266 = vpop.f32.mrf.mxu0
      %v2267 = vpop.f32.mrf.mxu0
      %v2268 = vadd.f32 0.0, %v2267
      %v2269 = vpop.f32.mrf.mxu0
      %2270 = vmatprep.mubr.bf16.mxu0 0
      %2271 = vmatmul.mubr.bf16.gmra.mxu0 %v1495
      %v2272 = vpop.f32.mrf.mxu0
      %v2273 = vadd.f32 0.0, %v2272
      %v2274 = vpop.f32.mrf.mxu0
      %v2275 = vpop.f32.mrf.mxu0
      %v2276 = vadd.f32 0.0, %v2275
      %v2277 = vpop.f32.mrf.mxu0
      %2278 = vmatprep.mubr.bf16.mxu0 0
      %2279 = vmatmul.mubr.bf16.gmra.mxu0 %v1498
      %v2280 = vpop.f32.mrf.mxu0
      %v2281 = vadd.f32 0.0, %v2280
      %v2282 = vpop.f32.mrf.mxu0
      %v2283 = vpop.f32.mrf.mxu0
      %v2284 = vadd.f32 0.0, %v2283
      %v2285 = vpop.f32.mrf.mxu0
      %2286 = vmatprep.mubr.bf16.mxu0 0
      %2287 = vmatmul.mubr.bf16.gmra.mxu0 %v1501
      %v2288 = vpop.f32.mrf.mxu0
      %v2289 = vadd.f32 0.0, %v2288
      %v2290 = vpop.f32.mrf.mxu0
      %v2291 = vpop.f32.mrf.mxu0
      %v2292 = vadd.f32 0.0, %v2291
      %v2293 = vpop.f32.mrf.mxu0
      %2294 = vmatprep.mubr.bf16.mxu0 0
      %2295 = vmatmul.mubr.bf16.gmra.mxu0 %v1504
      %v2296 = vpop.f32.mrf.mxu0
      %v2297 = vadd.f32 0.0, %v2296
      %v2298 = vpop.f32.mrf.mxu0
      %v2299 = vpop.f32.mrf.mxu0
      %v2300 = vadd.f32 0.0, %v2299
      %v2301 = vpop.f32.mrf.mxu0
      %2302 = vmatprep.mubr.bf16.mxu0 0
      %2303 = vmatmul.mubr.bf16.gmra.mxu0 %v1507
      %v2304 = vpop.f32.mrf.mxu0
      %v2305 = vadd.f32 0.0, %v2304
      %v2306 = vpop.f32.mrf.mxu0
      %v2307 = vpop.f32.mrf.mxu0
      %v2308 = vadd.f32 0.0, %v2307
      %v2309 = vpop.f32.mrf.mxu0
      %2310 = vmatprep.mubr.bf16.mxu0 0
      %2311 = vmatmul.mubr.bf16.gmra.mxu0 %v2153
      %v2312 = vpop.f32.mrf.mxu0
      %v2313 = vadd.f32 0.0, %v2312
      %v2314 = vpop.f32.mrf.mxu0
      %v2315 = vpop.f32.mrf.mxu0
      %v2316 = vadd.f32 0.0, %v2315
      %v2317 = vpop.f32.mrf.mxu0
      %2318 = vdwg.mxu0
      %v2319 = vadd.f32 %v2107, %v2193
      %v2320 = vadd.f32 %v2108, %v2196
      %v2321 = vadd.f32 %v2109, %v2201
      %v2322 = vadd.f32 %v2110, %v2204
      %v2323 = vadd.f32 %v2111, %v2209
      %v2324 = vadd.f32 %v2112, %v2212
      %v2325 = vadd.f32 %v2113, %v2217
      %v2326 = vadd.f32 %v2114, %v2220
      %v2327 = vadd.f32 %v2115, %v2225
      %v2328 = vadd.f32 %v2116, %v2228
      %v2329 = vadd.f32 %v2117, %v2233
      %v2330 = vadd.f32 %v2118, %v2236
      %v2331 = vadd.f32 %v2119, %v2241
      %v2332 = vadd.f32 %v2120, %v2244
      %v2333 = vadd.f32 %v2121, %v2249
      %v2334 = vadd.f32 %v2122, %v2252
      %v2335 = vadd.f32 %v2123, %v2257
      %v2336 = vadd.f32 %v2124, %v2260
      %v2337 = vadd.f32 %v2125, %v2265
      %v2338 = vadd.f32 %v2126, %v2268
      %v2339 = vadd.f32 %v2127, %v2273
      %v2340 = vadd.f32 %v2128, %v2276
      %v2341 = vadd.f32 %v2129, %v2281
      %v2342 = vadd.f32 %v2130, %v2284
      %v2343 = vadd.f32 %v2131, %v2289
      %v2344 = vadd.f32 %v2132, %v2292
      %v2345 = vadd.f32 %v2133, %v2297
      %v2346 = vadd.f32 %v2134, %v2300
      %v2347 = vadd.f32 %v2135, %v2305
      %v2348 = vadd.f32 %v2136, %v2308
      %v2349 = vadd.f32 %v2137, %v2313
      %v2350 = vadd.f32 %v2138, %v2316
      %s2351 = scalar_lea.vmem %s1, 12
      %v2352 = vld [vmem:[%s2351] sm:$0x3]
      %v2355 = vunpack.c.l.b16 %v262
      %v2356 = vunpack.c.l.b16 %v263
      %v2357 = vpack.c.b16 %v2356, %v2355
      %v2359 = vsel %vm353, %v2357, 0
      %v2362 = vsel %vm402, %v2352, 0
      %2364 = vmatprep.subr.bf16.mxu0 0
      %2365 = vmatpush1.bf16.msra.mxu0 0
      %2366 = vmatprep.subr.bf16.mxu0 0
      %2367 = vmatpush1.bf16.msra.mxu0 0
      %2368 = vmatprep.subr.bf16.mxu0 0
      %2369 = vmatpush1.bf16.msra.mxu0 0
      %2370 = vmatprep.subr.bf16.mxu0 0
      %2371 = vmatpush1.bf16.msra.mxu0 0
      %2372 = vmatprep.subr.bf16.mxu0 0
      %2373 = vmatpush1.bf16.msra.mxu0 0
      %2374 = vmatprep.subr.bf16.mxu0 0
      %2375 = vmatpush1.bf16.msra.mxu0 0
      %2376 = vmatprep.subr.bf16.mxu0 0
      %2377 = vmatpush1.bf16.msra.mxu0 0
      %2378 = vmatprep.subr.bf16.mxu0 0
      %2379 = vmatpush1.bf16.msra.mxu0 %v2362
      %2380 = vmatprep.subr.bf16.mxu0 0
      %2381 = vmatpush2.bf16.msra.mxu0 0
      %2382 = vmatprep.subr.bf16.mxu0 0
      %2383 = vmatpush2.bf16.msra.mxu0 0
      %2384 = vmatprep.subr.bf16.mxu0 0
      %2385 = vmatpush2.bf16.msra.mxu0 0
      %2386 = vmatprep.subr.bf16.mxu0 0
      %2387 = vmatpush2.bf16.msra.mxu0 0
      %2388 = vmatprep.subr.bf16.mxu0 0
      %2389 = vmatpush2.bf16.msra.mxu0 0
      %2390 = vmatprep.subr.bf16.mxu0 0
      %2391 = vmatpush2.bf16.msra.mxu0 0
      %2392 = vmatprep.subr.bf16.mxu0 0
      %2393 = vmatpush2.bf16.msra.mxu0 0
      %2394 = vmatprep.subr.bf16.mxu0 0
      %2395 = vmatpush2.bf16.msra.mxu0 0
      %2396 = vmatprep.mubr.bf16.mxu0 0
      %2397 = vmatmul.mubr.bf16.gmra.mxu0 %v361
      %v2398 = vpop.f32.mrf.mxu0
      %v2399 = vadd.f32 0.0, %v2398
      %v2400 = vpop.f32.mrf.mxu0
      %v2401 = vpop.f32.mrf.mxu0
      %v2402 = vadd.f32 0.0, %v2401
      %v2403 = vpop.f32.mrf.mxu0
      %2404 = vmatprep.mubr.bf16.mxu0 0
      %2405 = vmatmul.mubr.bf16.gmra.mxu0 %v364
      %v2406 = vpop.f32.mrf.mxu0
      %v2407 = vadd.f32 0.0, %v2406
      %v2408 = vpop.f32.mrf.mxu0
      %v2409 = vpop.f32.mrf.mxu0
      %v2410 = vadd.f32 0.0, %v2409
      %v2411 = vpop.f32.mrf.mxu0
      %2412 = vmatprep.mubr.bf16.mxu0 0
      %2413 = vmatmul.mubr.bf16.gmra.mxu0 %v367
      %v2414 = vpop.f32.mrf.mxu0
      %v2415 = vadd.f32 0.0, %v2414
      %v2416 = vpop.f32.mrf.mxu0
      %v2417 = vpop.f32.mrf.mxu0
      %v2418 = vadd.f32 0.0, %v2417
      %v2419 = vpop.f32.mrf.mxu0
      %2420 = vmatprep.mubr.bf16.mxu0 0
      %2421 = vmatmul.mubr.bf16.gmra.mxu0 %v370
      %v2422 = vpop.f32.mrf.mxu0
      %v2423 = vadd.f32 0.0, %v2422
      %v2424 = vpop.f32.mrf.mxu0
      %v2425 = vpop.f32.mrf.mxu0
      %v2426 = vadd.f32 0.0, %v2425
      %v2427 = vpop.f32.mrf.mxu0
      %2428 = vmatprep.mubr.bf16.mxu0 0
      %2429 = vmatmul.mubr.bf16.gmra.mxu0 %v373
      %v2430 = vpop.f32.mrf.mxu0
      %v2431 = vadd.f32 0.0, %v2430
      %v2432 = vpop.f32.mrf.mxu0
      %v2433 = vpop.f32.mrf.mxu0
      %v2434 = vadd.f32 0.0, %v2433
      %v2435 = vpop.f32.mrf.mxu0
      %2436 = vmatprep.mubr.bf16.mxu0 0
      %2437 = vmatmul.mubr.bf16.gmra.mxu0 %v376
      %v2438 = vpop.f32.mrf.mxu0
      %v2439 = vadd.f32 0.0, %v2438
      %v2440 = vpop.f32.mrf.mxu0
      %v2441 = vpop.f32.mrf.mxu0
      %v2442 = vadd.f32 0.0, %v2441
      %v2443 = vpop.f32.mrf.mxu0
      %2444 = vmatprep.mubr.bf16.mxu0 0
      %2445 = vmatmul.mubr.bf16.gmra.mxu0 %v379
      %v2446 = vpop.f32.mrf.mxu0
      %v2447 = vadd.f32 0.0, %v2446
      %v2448 = vpop.f32.mrf.mxu0
      %v2449 = vpop.f32.mrf.mxu0
      %v2450 = vadd.f32 0.0, %v2449
      %v2451 = vpop.f32.mrf.mxu0
      %2452 = vmatprep.mubr.bf16.mxu0 0
      %2453 = vmatmul.mubr.bf16.gmra.mxu0 %v382
      %v2454 = vpop.f32.mrf.mxu0
      %v2455 = vadd.f32 0.0, %v2454
      %v2456 = vpop.f32.mrf.mxu0
      %v2457 = vpop.f32.mrf.mxu0
      %v2458 = vadd.f32 0.0, %v2457
      %v2459 = vpop.f32.mrf.mxu0
      %2460 = vmatprep.mubr.bf16.mxu0 0
      %2461 = vmatmul.mubr.bf16.gmra.mxu0 %v385
      %v2462 = vpop.f32.mrf.mxu0
      %v2463 = vadd.f32 0.0, %v2462
      %v2464 = vpop.f32.mrf.mxu0
      %v2465 = vpop.f32.mrf.mxu0
      %v2466 = vadd.f32 0.0, %v2465
      %v2467 = vpop.f32.mrf.mxu0
      %2468 = vmatprep.mubr.bf16.mxu0 0
      %2469 = vmatmul.mubr.bf16.gmra.mxu0 %v388
      %v2470 = vpop.f32.mrf.mxu0
      %v2471 = vadd.f32 0.0, %v2470
      %v2472 = vpop.f32.mrf.mxu0
      %v2473 = vpop.f32.mrf.mxu0
      %v2474 = vadd.f32 0.0, %v2473
      %v2475 = vpop.f32.mrf.mxu0
      %2476 = vmatprep.mubr.bf16.mxu0 0
      %2477 = vmatmul.mubr.bf16.gmra.mxu0 %v391
      %v2478 = vpop.f32.mrf.mxu0
      %v2479 = vadd.f32 0.0, %v2478
      %v2480 = vpop.f32.mrf.mxu0
      %v2481 = vpop.f32.mrf.mxu0
      %v2482 = vadd.f32 0.0, %v2481
      %v2483 = vpop.f32.mrf.mxu0
      %2484 = vmatprep.mubr.bf16.mxu0 0
      %2485 = vmatmul.mubr.bf16.gmra.mxu0 %v394
      %v2486 = vpop.f32.mrf.mxu0
      %v2487 = vadd.f32 0.0, %v2486
      %v2488 = vpop.f32.mrf.mxu0
      %v2489 = vpop.f32.mrf.mxu0
      %v2490 = vadd.f32 0.0, %v2489
      %v2491 = vpop.f32.mrf.mxu0
      %2492 = vmatprep.mubr.bf16.mxu0 0
      %2493 = vmatmul.mubr.bf16.gmra.mxu0 %v397
      %v2494 = vpop.f32.mrf.mxu0
      %v2495 = vadd.f32 0.0, %v2494
      %v2496 = vpop.f32.mrf.mxu0
      %v2497 = vpop.f32.mrf.mxu0
      %v2498 = vadd.f32 0.0, %v2497
      %v2499 = vpop.f32.mrf.mxu0
      %2500 = vmatprep.mubr.bf16.mxu0 0
      %2501 = vmatmul.mubr.bf16.gmra.mxu0 %v400
      %v2502 = vpop.f32.mrf.mxu0
      %v2503 = vadd.f32 0.0, %v2502
      %v2504 = vpop.f32.mrf.mxu0
      %v2505 = vpop.f32.mrf.mxu0
      %v2506 = vadd.f32 0.0, %v2505
      %v2507 = vpop.f32.mrf.mxu0
      %2508 = vmatprep.mubr.bf16.mxu0 0
      %2509 = vmatmul.mubr.bf16.gmra.mxu0 %v1713
      %v2510 = vpop.f32.mrf.mxu0
      %v2511 = vadd.f32 0.0, %v2510
      %v2512 = vpop.f32.mrf.mxu0
      %v2513 = vpop.f32.mrf.mxu0
      %v2514 = vadd.f32 0.0, %v2513
      %v2515 = vpop.f32.mrf.mxu0
      %2516 = vmatprep.mubr.bf16.mxu0 0
      %2517 = vmatmul.mubr.bf16.gmra.mxu0 %v2359
      %v2518 = vpop.f32.mrf.mxu0
      %v2519 = vadd.f32 0.0, %v2518
      %v2520 = vpop.f32.mrf.mxu0
      %v2521 = vpop.f32.mrf.mxu0
      %v2522 = vadd.f32 0.0, %v2521
      %v2523 = vpop.f32.mrf.mxu0
      %2524 = vdwg.mxu0
      %v2525 = vadd.f32 %v2319, %v2399
      %v2526 = vadd.f32 %v2320, %v2402
      %v2527 = vadd.f32 %v2321, %v2407
      %v2528 = vadd.f32 %v2322, %v2410
      %v2529 = vadd.f32 %v2323, %v2415
      %v2530 = vadd.f32 %v2324, %v2418
      %v2531 = vadd.f32 %v2325, %v2423
      %v2532 = vadd.f32 %v2326, %v2426
      %v2533 = vadd.f32 %v2327, %v2431
      %v2534 = vadd.f32 %v2328, %v2434
      %v2535 = vadd.f32 %v2329, %v2439
      %v2536 = vadd.f32 %v2330, %v2442
      %v2537 = vadd.f32 %v2331, %v2447
      %v2538 = vadd.f32 %v2332, %v2450
      %v2539 = vadd.f32 %v2333, %v2455
      %v2540 = vadd.f32 %v2334, %v2458
      %v2541 = vadd.f32 %v2335, %v2463
      %v2542 = vadd.f32 %v2336, %v2466
      %v2543 = vadd.f32 %v2337, %v2471
      %v2544 = vadd.f32 %v2338, %v2474
      %v2545 = vadd.f32 %v2339, %v2479
      %v2546 = vadd.f32 %v2340, %v2482
      %v2547 = vadd.f32 %v2341, %v2487
      %v2548 = vadd.f32 %v2342, %v2490
      %v2549 = vadd.f32 %v2343, %v2495
      %v2550 = vadd.f32 %v2344, %v2498
      %v2551 = vadd.f32 %v2345, %v2503
      %v2552 = vadd.f32 %v2346, %v2506
      %v2553 = vadd.f32 %v2347, %v2511
      %v2554 = vadd.f32 %v2348, %v2514
      %v2555 = vadd.f32 %v2349, %v2519
      %v2556 = vadd.f32 %v2350, %v2522
      %v2558 = vshrl.u32 %v262, 16
      %v2560 = vrot.slane %v2558, 4
      %v2561 = vshll.u32 %v262, 16
      %v2563 = vrot.slane %v2561, 5
      %v2564 = vor.u32 %v2560, %v2563
      %v2565 = vrot.slane %v2564, 4
      %v2567 = vshll.u32 %v263, 16
      %v2569 = vrot.slane %v2567, 5
      %v2570 = vsel %vm601, %v2565, %v2569
      %v2571 = vshrl.u32 %v263, 16
      %v2573 = vrot.slane %v2571, 4
      %v2574 = vor.u32 %v2573, %v2569
      %v2575 = vrot.slane %v2574, 4
      %v2577 = vshll.u32 %v264, 16
      %v2579 = vrot.slane %v2577, 5
      %v2580 = vsel %vm601, %v2575, %v2579
      %s2581 = scalar_lea.vmem %s1, 14
      %v2582 = vld [vmem:[%s2581] sm:$0x3]
      %v2583 = vunpack.c.l.b16 %v2570
      %v2584 = vunpack.c.l.b16 %v2580
      %v2585 = vpack.c.b16 %v2584, %v2583
      %v2587 = vsel %vm353, %v2585, 0
      %v2590 = vsel %vm402, %v2582, 0
      %2592 = vmatprep.subr.bf16.mxu0 0
      %2593 = vmatpush1.bf16.msra.mxu0 0
      %2594 = vmatprep.subr.bf16.mxu0 0
      %2595 = vmatpush1.bf16.msra.mxu0 0
      %2596 = vmatprep.subr.bf16.mxu0 0
      %2597 = vmatpush1.bf16.msra.mxu0 0
      %2598 = vmatprep.subr.bf16.mxu0 0
      %2599 = vmatpush1.bf16.msra.mxu0 0
      %2600 = vmatprep.subr.bf16.mxu0 0
      %2601 = vmatpush1.bf16.msra.mxu0 0
      %2602 = vmatprep.subr.bf16.mxu0 0
      %2603 = vmatpush1.bf16.msra.mxu0 0
      %2604 = vmatprep.subr.bf16.mxu0 0
      %2605 = vmatpush1.bf16.msra.mxu0 0
      %2606 = vmatprep.subr.bf16.mxu0 0
      %2607 = vmatpush1.bf16.msra.mxu0 %v2590
      %2608 = vmatprep.subr.bf16.mxu0 0
      %2609 = vmatpush2.bf16.msra.mxu0 0
      %2610 = vmatprep.subr.bf16.mxu0 0
      %2611 = vmatpush2.bf16.msra.mxu0 0
      %2612 = vmatprep.subr.bf16.mxu0 0
      %2613 = vmatpush2.bf16.msra.mxu0 0
      %2614 = vmatprep.subr.bf16.mxu0 0
      %2615 = vmatpush2.bf16.msra.mxu0 0
      %2616 = vmatprep.subr.bf16.mxu0 0
      %2617 = vmatpush2.bf16.msra.mxu0 0
      %2618 = vmatprep.subr.bf16.mxu0 0
      %2619 = vmatpush2.bf16.msra.mxu0 0
      %2620 = vmatprep.subr.bf16.mxu0 0
      %2621 = vmatpush2.bf16.msra.mxu0 0
      %2622 = vmatprep.subr.bf16.mxu0 0
      %2623 = vmatpush2.bf16.msra.mxu0 0
      %2624 = vmatprep.mubr.bf16.mxu0 0
      %2625 = vmatmul.mubr.bf16.gmra.mxu0 %v1043
      %v2626 = vpop.f32.mrf.mxu0
      %v2627 = vadd.f32 0.0, %v2626
      %v2628 = vpop.f32.mrf.mxu0
      %v2629 = vpop.f32.mrf.mxu0
      %v2630 = vadd.f32 0.0, %v2629
      %v2631 = vpop.f32.mrf.mxu0
      %2632 = vmatprep.mubr.bf16.mxu0 0
      %2633 = vmatmul.mubr.bf16.gmra.mxu0 %v1046
      %v2634 = vpop.f32.mrf.mxu0
      %v2635 = vadd.f32 0.0, %v2634
      %v2636 = vpop.f32.mrf.mxu0
      %v2637 = vpop.f32.mrf.mxu0
      %v2638 = vadd.f32 0.0, %v2637
      %v2639 = vpop.f32.mrf.mxu0
      %2640 = vmatprep.mubr.bf16.mxu0 0
      %2641 = vmatmul.mubr.bf16.gmra.mxu0 %v1049
      %v2642 = vpop.f32.mrf.mxu0
      %v2643 = vadd.f32 0.0, %v2642
      %v2644 = vpop.f32.mrf.mxu0
      %v2645 = vpop.f32.mrf.mxu0
      %v2646 = vadd.f32 0.0, %v2645
      %v2647 = vpop.f32.mrf.mxu0
      %2648 = vmatprep.mubr.bf16.mxu0 0
      %2649 = vmatmul.mubr.bf16.gmra.mxu0 %v1052
      %v2650 = vpop.f32.mrf.mxu0
      %v2651 = vadd.f32 0.0, %v2650
      %v2652 = vpop.f32.mrf.mxu0
      %v2653 = vpop.f32.mrf.mxu0
      %v2654 = vadd.f32 0.0, %v2653
      %v2655 = vpop.f32.mrf.mxu0
      %2656 = vmatprep.mubr.bf16.mxu0 0
      %2657 = vmatmul.mubr.bf16.gmra.mxu0 %v1055
      %v2658 = vpop.f32.mrf.mxu0
      %v2659 = vadd.f32 0.0, %v2658
      %v2660 = vpop.f32.mrf.mxu0
      %v2661 = vpop.f32.mrf.mxu0
      %v2662 = vadd.f32 0.0, %v2661
      %v2663 = vpop.f32.mrf.mxu0
      %2664 = vmatprep.mubr.bf16.mxu0 0
      %2665 = vmatmul.mubr.bf16.gmra.mxu0 %v1058
      %v2666 = vpop.f32.mrf.mxu0
      %v2667 = vadd.f32 0.0, %v2666
      %v2668 = vpop.f32.mrf.mxu0
      %v2669 = vpop.f32.mrf.mxu0
      %v2670 = vadd.f32 0.0, %v2669
      %v2671 = vpop.f32.mrf.mxu0
      %2672 = vmatprep.mubr.bf16.mxu0 0
      %2673 = vmatmul.mubr.bf16.gmra.mxu0 %v1061
      %v2674 = vpop.f32.mrf.mxu0
      %v2675 = vadd.f32 0.0, %v2674
      %v2676 = vpop.f32.mrf.mxu0
      %v2677 = vpop.f32.mrf.mxu0
      %v2678 = vadd.f32 0.0, %v2677
      %v2679 = vpop.f32.mrf.mxu0
      %2680 = vmatprep.mubr.bf16.mxu0 0
      %2681 = vmatmul.mubr.bf16.gmra.mxu0 %v1064
      %v2682 = vpop.f32.mrf.mxu0
      %v2683 = vadd.f32 0.0, %v2682
      %v2684 = vpop.f32.mrf.mxu0
      %v2685 = vpop.f32.mrf.mxu0
      %v2686 = vadd.f32 0.0, %v2685
      %v2687 = vpop.f32.mrf.mxu0
      %2688 = vmatprep.mubr.bf16.mxu0 0
      %2689 = vmatmul.mubr.bf16.gmra.mxu0 %v1067
      %v2690 = vpop.f32.mrf.mxu0
      %v2691 = vadd.f32 0.0, %v2690
      %v2692 = vpop.f32.mrf.mxu0
      %v2693 = vpop.f32.mrf.mxu0
      %v2694 = vadd.f32 0.0, %v2693
      %v2695 = vpop.f32.mrf.mxu0
      %2696 = vmatprep.mubr.bf16.mxu0 0
      %2697 = vmatmul.mubr.bf16.gmra.mxu0 %v1070
      %v2698 = vpop.f32.mrf.mxu0
      %v2699 = vadd.f32 0.0, %v2698
      %v2700 = vpop.f32.mrf.mxu0
      %v2701 = vpop.f32.mrf.mxu0
      %v2702 = vadd.f32 0.0, %v2701
      %v2703 = vpop.f32.mrf.mxu0
      %2704 = vmatprep.mubr.bf16.mxu0 0
      %2705 = vmatmul.mubr.bf16.gmra.mxu0 %v1073
      %v2706 = vpop.f32.mrf.mxu0
      %v2707 = vadd.f32 0.0, %v2706
      %v2708 = vpop.f32.mrf.mxu0
      %v2709 = vpop.f32.mrf.mxu0
      %v2710 = vadd.f32 0.0, %v2709
      %v2711 = vpop.f32.mrf.mxu0
      %2712 = vmatprep.mubr.bf16.mxu0 0
      %2713 = vmatmul.mubr.bf16.gmra.mxu0 %v1076
      %v2714 = vpop.f32.mrf.mxu0
      %v2715 = vadd.f32 0.0, %v2714
      %v2716 = vpop.f32.mrf.mxu0
      %v2717 = vpop.f32.mrf.mxu0
      %v2718 = vadd.f32 0.0, %v2717
      %v2719 = vpop.f32.mrf.mxu0
      %2720 = vmatprep.mubr.bf16.mxu0 0
      %2721 = vmatmul.mubr.bf16.gmra.mxu0 %v1079
      %v2722 = vpop.f32.mrf.mxu0
      %v2723 = vadd.f32 0.0, %v2722
      %v2724 = vpop.f32.mrf.mxu0
      %v2725 = vpop.f32.mrf.mxu0
      %v2726 = vadd.f32 0.0, %v2725
      %v2727 = vpop.f32.mrf.mxu0
      %2728 = vmatprep.mubr.bf16.mxu0 0
      %2729 = vmatmul.mubr.bf16.gmra.mxu0 %v1082
      %v2730 = vpop.f32.mrf.mxu0
      %v2731 = vadd.f32 0.0, %v2730
      %v2732 = vpop.f32.mrf.mxu0
      %v2733 = vpop.f32.mrf.mxu0
      %v2734 = vadd.f32 0.0, %v2733
      %v2735 = vpop.f32.mrf.mxu0
      %2736 = vmatprep.mubr.bf16.mxu0 0
      %2737 = vmatmul.mubr.bf16.gmra.mxu0 %v1941
      %v2738 = vpop.f32.mrf.mxu0
      %v2739 = vadd.f32 0.0, %v2738
      %v2740 = vpop.f32.mrf.mxu0
      %v2741 = vpop.f32.mrf.mxu0
      %v2742 = vadd.f32 0.0, %v2741
      %v2743 = vpop.f32.mrf.mxu0
      %2744 = vmatprep.mubr.bf16.mxu0 0
      %2745 = vmatmul.mubr.bf16.gmra.mxu0 %v2587
      %v2746 = vpop.f32.mrf.mxu0
      %v2747 = vadd.f32 0.0, %v2746
      %v2748 = vpop.f32.mrf.mxu0
      %v2749 = vpop.f32.mrf.mxu0
      %v2750 = vadd.f32 0.0, %v2749
      %v2751 = vpop.f32.mrf.mxu0
      %2752 = vdwg.mxu0
      %v2753 = vadd.f32 %v2525, %v2627
      %v2754 = vadd.f32 %v2526, %v2630
      %v2755 = vadd.f32 %v2527, %v2635
      %v2756 = vadd.f32 %v2528, %v2638
      %v2757 = vadd.f32 %v2529, %v2643
      %v2758 = vadd.f32 %v2530, %v2646
      %v2759 = vadd.f32 %v2531, %v2651
      %v2760 = vadd.f32 %v2532, %v2654
      %v2761 = vadd.f32 %v2533, %v2659
      %v2762 = vadd.f32 %v2534, %v2662
      %v2763 = vadd.f32 %v2535, %v2667
      %v2764 = vadd.f32 %v2536, %v2670
      %v2765 = vadd.f32 %v2537, %v2675
      %v2766 = vadd.f32 %v2538, %v2678
      %v2767 = vadd.f32 %v2539, %v2683
      %v2768 = vadd.f32 %v2540, %v2686
      %v2769 = vadd.f32 %v2541, %v2691
      %v2770 = vadd.f32 %v2542, %v2694
      %v2771 = vadd.f32 %v2543, %v2699
      %v2772 = vadd.f32 %v2544, %v2702
      %v2773 = vadd.f32 %v2545, %v2707
      %v2774 = vadd.f32 %v2546, %v2710
      %v2775 = vadd.f32 %v2547, %v2715
      %v2776 = vadd.f32 %v2548, %v2718
      %v2777 = vadd.f32 %v2549, %v2723
      %v2778 = vadd.f32 %v2550, %v2726
      %v2779 = vadd.f32 %v2551, %v2731
      %v2780 = vadd.f32 %v2552, %v2734
      %v2781 = vadd.f32 %v2553, %v2739
      %v2782 = vadd.f32 %v2554, %v2742
      %v2783 = vadd.f32 %v2555, %v2747
      %v2784 = vadd.f32 %v2556, %v2750
      %v2786 = vrot.slane %v262, 5
      %v2787 = vrot.slane %v2786, 4
      %v2788 = vrot.slane %v263, 5
      %v2789 = vsel %vm1298, %v2787, %v2788
      %v2790 = vrot.slane %v2788, 4
      %v2791 = vrot.slane %v264, 5
      %v2792 = vsel %vm1298, %v2790, %v2791
      %s2793 = scalar_lea.vmem %s1, 16
      %v2794 = vld [vmem:[%s2793] sm:$0x3]
      %v2795 = vunpack.c.l.b16 %v2789
      %v2796 = vunpack.c.l.b16 %v2792
      %v2797 = vpack.c.b16 %v2796, %v2795
      %v2799 = vsel %vm353, %v2797, 0
      %v2802 = vsel %vm402, %v2794, 0
      %2804 = vmatprep.subr.bf16.mxu0 0
      %2805 = vmatpush1.bf16.msra.mxu0 0
      %2806 = vmatprep.subr.bf16.mxu0 0
      %2807 = vmatpush1.bf16.msra.mxu0 0
      %2808 = vmatprep.subr.bf16.mxu0 0
      %2809 = vmatpush1.bf16.msra.mxu0 0
      %2810 = vmatprep.subr.bf16.mxu0 0
      %2811 = vmatpush1.bf16.msra.mxu0 0
      %2812 = vmatprep.subr.bf16.mxu0 0
      %2813 = vmatpush1.bf16.msra.mxu0 0
      %2814 = vmatprep.subr.bf16.mxu0 0
      %2815 = vmatpush1.bf16.msra.mxu0 0
      %2816 = vmatprep.subr.bf16.mxu0 0
      %2817 = vmatpush1.bf16.msra.mxu0 0
      %2818 = vmatprep.subr.bf16.mxu0 0
      %2819 = vmatpush1.bf16.msra.mxu0 %v2802
      %2820 = vmatprep.subr.bf16.mxu0 0
      %2821 = vmatpush2.bf16.msra.mxu0 0
      %2822 = vmatprep.subr.bf16.mxu0 0
      %2823 = vmatpush2.bf16.msra.mxu0 0
      %2824 = vmatprep.subr.bf16.mxu0 0
      %2825 = vmatpush2.bf16.msra.mxu0 0
      %2826 = vmatprep.subr.bf16.mxu0 0
      %2827 = vmatpush2.bf16.msra.mxu0 0
      %2828 = vmatprep.subr.bf16.mxu0 0
      %2829 = vmatpush2.bf16.msra.mxu0 0
      %2830 = vmatprep.subr.bf16.mxu0 0
      %2831 = vmatpush2.bf16.msra.mxu0 0
      %2832 = vmatprep.subr.bf16.mxu0 0
      %2833 = vmatpush2.bf16.msra.mxu0 0
      %2834 = vmatprep.subr.bf16.mxu0 0
      %2835 = vmatpush2.bf16.msra.mxu0 0
      %2836 = vmatprep.mubr.bf16.mxu0 0
      %2837 = vmatmul.mubr.bf16.gmra.mxu0 %v1468
      %v2838 = vpop.f32.mrf.mxu0
      %v2839 = vadd.f32 0.0, %v2838
      %v2840 = vpop.f32.mrf.mxu0
      %v2841 = vpop.f32.mrf.mxu0
      %v2842 = vadd.f32 0.0, %v2841
      %v2843 = vpop.f32.mrf.mxu0
      %2844 = vmatprep.mubr.bf16.mxu0 0
      %2845 = vmatmul.mubr.bf16.gmra.mxu0 %v1471
      %v2846 = vpop.f32.mrf.mxu0
      %v2847 = vadd.f32 0.0, %v2846
      %v2848 = vpop.f32.mrf.mxu0
      %v2849 = vpop.f32.mrf.mxu0
      %v2850 = vadd.f32 0.0, %v2849
      %v2851 = vpop.f32.mrf.mxu0
      %2852 = vmatprep.mubr.bf16.mxu0 0
      %2853 = vmatmul.mubr.bf16.gmra.mxu0 %v1474
      %v2854 = vpop.f32.mrf.mxu0
      %v2855 = vadd.f32 0.0, %v2854
      %v2856 = vpop.f32.mrf.mxu0
      %v2857 = vpop.f32.mrf.mxu0
      %v2858 = vadd.f32 0.0, %v2857
      %v2859 = vpop.f32.mrf.mxu0
      %2860 = vmatprep.mubr.bf16.mxu0 0
      %2861 = vmatmul.mubr.bf16.gmra.mxu0 %v1477
      %v2862 = vpop.f32.mrf.mxu0
      %v2863 = vadd.f32 0.0, %v2862
      %v2864 = vpop.f32.mrf.mxu0
      %v2865 = vpop.f32.mrf.mxu0
      %v2866 = vadd.f32 0.0, %v2865
      %v2867 = vpop.f32.mrf.mxu0
      %2868 = vmatprep.mubr.bf16.mxu0 0
      %2869 = vmatmul.mubr.bf16.gmra.mxu0 %v1480
      %v2870 = vpop.f32.mrf.mxu0
      %v2871 = vadd.f32 0.0, %v2870
      %v2872 = vpop.f32.mrf.mxu0
      %v2873 = vpop.f32.mrf.mxu0
      %v2874 = vadd.f32 0.0, %v2873
      %v2875 = vpop.f32.mrf.mxu0
      %2876 = vmatprep.mubr.bf16.mxu0 0
      %2877 = vmatmul.mubr.bf16.gmra.mxu0 %v1483
      %v2878 = vpop.f32.mrf.mxu0
      %v2879 = vadd.f32 0.0, %v2878
      %v2880 = vpop.f32.mrf.mxu0
      %v2881 = vpop.f32.mrf.mxu0
      %v2882 = vadd.f32 0.0, %v2881
      %v2883 = vpop.f32.mrf.mxu0
      %2884 = vmatprep.mubr.bf16.mxu0 0
      %2885 = vmatmul.mubr.bf16.gmra.mxu0 %v1486
      %v2886 = vpop.f32.mrf.mxu0
      %v2887 = vadd.f32 0.0, %v2886
      %v2888 = vpop.f32.mrf.mxu0
      %v2889 = vpop.f32.mrf.mxu0
      %v2890 = vadd.f32 0.0, %v2889
      %v2891 = vpop.f32.mrf.mxu0
      %2892 = vmatprep.mubr.bf16.mxu0 0
      %2893 = vmatmul.mubr.bf16.gmra.mxu0 %v1489
      %v2894 = vpop.f32.mrf.mxu0
      %v2895 = vadd.f32 0.0, %v2894
      %v2896 = vpop.f32.mrf.mxu0
      %v2897 = vpop.f32.mrf.mxu0
      %v2898 = vadd.f32 0.0, %v2897
      %v2899 = vpop.f32.mrf.mxu0
      %2900 = vmatprep.mubr.bf16.mxu0 0
      %2901 = vmatmul.mubr.bf16.gmra.mxu0 %v1492
      %v2902 = vpop.f32.mrf.mxu0
      %v2903 = vadd.f32 0.0, %v2902
      %v2904 = vpop.f32.mrf.mxu0
      %v2905 = vpop.f32.mrf.mxu0
      %v2906 = vadd.f32 0.0, %v2905
      %v2907 = vpop.f32.mrf.mxu0
      %2908 = vmatprep.mubr.bf16.mxu0 0
      %2909 = vmatmul.mubr.bf16.gmra.mxu0 %v1495
      %v2910 = vpop.f32.mrf.mxu0
      %v2911 = vadd.f32 0.0, %v2910
      %v2912 = vpop.f32.mrf.mxu0
      %v2913 = vpop.f32.mrf.mxu0
      %v2914 = vadd.f32 0.0, %v2913
      %v2915 = vpop.f32.mrf.mxu0
      %2916 = vmatprep.mubr.bf16.mxu0 0
      %2917 = vmatmul.mubr.bf16.gmra.mxu0 %v1498
      %v2918 = vpop.f32.mrf.mxu0
      %v2919 = vadd.f32 0.0, %v2918
      %v2920 = vpop.f32.mrf.mxu0
      %v2921 = vpop.f32.mrf.mxu0
      %v2922 = vadd.f32 0.0, %v2921
      %v2923 = vpop.f32.mrf.mxu0
      %2924 = vmatprep.mubr.bf16.mxu0 0
      %2925 = vmatmul.mubr.bf16.gmra.mxu0 %v1501
      %v2926 = vpop.f32.mrf.mxu0
      %v2927 = vadd.f32 0.0, %v2926
      %v2928 = vpop.f32.mrf.mxu0
      %v2929 = vpop.f32.mrf.mxu0
      %v2930 = vadd.f32 0.0, %v2929
      %v2931 = vpop.f32.mrf.mxu0
      %2932 = vmatprep.mubr.bf16.mxu0 0
      %2933 = vmatmul.mubr.bf16.gmra.mxu0 %v1504
      %v2934 = vpop.f32.mrf.mxu0
      %v2935 = vadd.f32 0.0, %v2934
      %v2936 = vpop.f32.mrf.mxu0
      %v2937 = vpop.f32.mrf.mxu0
      %v2938 = vadd.f32 0.0, %v2937
      %v2939 = vpop.f32.mrf.mxu0
      %2940 = vmatprep.mubr.bf16.mxu0 0
      %2941 = vmatmul.mubr.bf16.gmra.mxu0 %v1507
      %v2942 = vpop.f32.mrf.mxu0
      %v2943 = vadd.f32 0.0, %v2942
      %v2944 = vpop.f32.mrf.mxu0
      %v2945 = vpop.f32.mrf.mxu0
      %v2946 = vadd.f32 0.0, %v2945
      %v2947 = vpop.f32.mrf.mxu0
      %2948 = vmatprep.mubr.bf16.mxu0 0
      %2949 = vmatmul.mubr.bf16.gmra.mxu0 %v2153
      %v2950 = vpop.f32.mrf.mxu0
      %v2951 = vadd.f32 0.0, %v2950
      %v2952 = vpop.f32.mrf.mxu0
      %v2953 = vpop.f32.mrf.mxu0
      %v2954 = vadd.f32 0.0, %v2953
      %v2955 = vpop.f32.mrf.mxu0
      %2956 = vmatprep.mubr.bf16.mxu0 0
      %2957 = vmatmul.mubr.bf16.gmra.mxu0 %v2799
      %v2958 = vpop.f32.mrf.mxu0
      %v2959 = vadd.f32 0.0, %v2958
      %v2960 = vpop.f32.mrf.mxu0
      %v2961 = vpop.f32.mrf.mxu0
      %v2962 = vadd.f32 0.0, %v2961
      %v2963 = vpop.f32.mrf.mxu0
      %2964 = vdwg.mxu0
      %v2965 = vadd.f32 %v2753, %v2839
      %v2966 = vadd.f32 %v2754, %v2842
      %v2967 = vadd.f32 %v2755, %v2847
      %v2968 = vadd.f32 %v2756, %v2850
      %v2969 = vadd.f32 %v2757, %v2855
      %v2970 = vadd.f32 %v2758, %v2858
      %v2971 = vadd.f32 %v2759, %v2863
      %v2972 = vadd.f32 %v2760, %v2866
      %v2973 = vadd.f32 %v2761, %v2871
      %v2974 = vadd.f32 %v2762, %v2874
      %v2975 = vadd.f32 %v2763, %v2879
      %v2976 = vadd.f32 %v2764, %v2882
      %v2977 = vadd.f32 %v2765, %v2887
      %v2978 = vadd.f32 %v2766, %v2890
      %v2979 = vadd.f32 %v2767, %v2895
      %v2980 = vadd.f32 %v2768, %v2898
      %v2981 = vadd.f32 %v2769, %v2903
      %v2982 = vadd.f32 %v2770, %v2906
      %v2983 = vadd.f32 %v2771, %v2911
      %v2984 = vadd.f32 %v2772, %v2914
      %v2985 = vadd.f32 %v2773, %v2919
      %v2986 = vadd.f32 %v2774, %v2922
      %v2987 = vadd.f32 %v2775, %v2927
      %v2988 = vadd.f32 %v2776, %v2930
      %v2989 = vadd.f32 %v2777, %v2935
      %v2990 = vadd.f32 %v2778, %v2938
      %v2991 = vadd.f32 %v2779, %v2943
      %v2992 = vadd.f32 %v2780, %v2946
      %v2993 = vadd.f32 %v2781, %v2951
      %v2994 = vadd.f32 %v2782, %v2954
      %v2995 = vadd.f32 %v2783, %v2959
      %v2996 = vadd.f32 %v2784, %v2962
      %v2997 = vmax.f32 %v2965, 0.0
      %v2998 = vmax.f32 %v2966, 0.0
      %v2999 = vmax.f32 %v2967, 0.0
      %v3000 = vmax.f32 %v2968, 0.0
      %v3001 = vmax.f32 %v2969, 0.0
      %v3002 = vmax.f32 %v2970, 0.0
      %v3003 = vmax.f32 %v2971, 0.0
      %v3004 = vmax.f32 %v2972, 0.0
      %v3005 = vmax.f32 %v2973, 0.0
      %v3006 = vmax.f32 %v2974, 0.0
      %v3007 = vmax.f32 %v2975, 0.0
      %v3008 = vmax.f32 %v2976, 0.0
      %v3009 = vmax.f32 %v2977, 0.0
      %v3010 = vmax.f32 %v2978, 0.0
      %v3011 = vmax.f32 %v2979, 0.0
      %v3012 = vmax.f32 %v2980, 0.0
      %v3013 = vmax.f32 %v2981, 0.0
      %v3014 = vmax.f32 %v2982, 0.0
      %v3015 = vmax.f32 %v2983, 0.0
      %v3016 = vmax.f32 %v2984, 0.0
      %v3017 = vmax.f32 %v2985, 0.0
      %v3018 = vmax.f32 %v2986, 0.0
      %v3019 = vmax.f32 %v2987, 0.0
      %v3020 = vmax.f32 %v2988, 0.0
      %v3021 = vmax.f32 %v2989, 0.0
      %v3022 = vmax.f32 %v2990, 0.0
      %v3023 = vmax.f32 %v2991, 0.0
      %v3024 = vmax.f32 %v2992, 0.0
      %v3025 = vmax.f32 %v2993, 0.0
      %v3026 = vmax.f32 %v2994, 0.0
      %v3027 = vmax.f32 %v2995, 0.0
      %v3028 = vmax.f32 %v2996, 0.0
      %3029 = vst [vmem:[%s208] sm:$0xff] %v2997
      %3030 = vst [vmem:[%s208 + $0x8] sm:$0xff] %v2998
      %3031 = vst [vmem:[%s208 + $0x10] sm:$0xff] %v2999
      %3032 = vst [vmem:[%s208 + $0x18] sm:$0xff] %v3000
      %3033 = vst [vmem:[%s208 + $0x20] sm:$0xff] %v3001
      %3034 = vst [vmem:[%s208 + $0x28] sm:$0xff] %v3002
      %3035 = vst [vmem:[%s208 + $0x30] sm:$0xff] %v3003
      %3036 = vst [vmem:[%s208 + $0x38] sm:$0xff] %v3004
      %3037 = vst [vmem:[%s208 + $0x40] sm:$0xff] %v3005
      %3038 = vst [vmem:[%s208 + $0x48] sm:$0xff] %v3006
      %3039 = vst [vmem:[%s208 + $0x50] sm:$0xff] %v3007
      %3040 = vst [vmem:[%s208 + $0x58] sm:$0xff] %v3008
      %3041 = vst [vmem:[%s208 + $0x60] sm:$0xff] %v3009
      %3042 = vst [vmem:[%s208 + $0x68] sm:$0xff] %v3010
      %3043 = vst [vmem:[%s208 + $0x70] sm:$0xff] %v3011
      %3044 = vst [vmem:[%s208 + $0x78] sm:$0xff] %v3012
      %3045 = vst [vmem:[%s208 + $0x80] sm:$0xff] %v3013
      %3046 = vst [vmem:[%s208 + $0x88] sm:$0xff] %v3014
      %3047 = vst [vmem:[%s208 + $0x90] sm:$0xff] %v3015
      %3048 = vst [vmem:[%s208 + $0x98] sm:$0xff] %v3016
      %3049 = vst [vmem:[%s208 + $0xa0] sm:$0xff] %v3017
      %3050 = vst [vmem:[%s208 + $0xa8] sm:$0xff] %v3018
      %3051 = vst [vmem:[%s208 + $0xb0] sm:$0xff] %v3019
      %3052 = vst [vmem:[%s208 + $0xb8] sm:$0xff] %v3020
      %3053 = vst [vmem:[%s208 + $0xc0] sm:$0xff] %v3021
      %3054 = vst [vmem:[%s208 + $0xc8] sm:$0xff] %v3022
      %3055 = vst [vmem:[%s208 + $0xd0] sm:$0xff] %v3023
      %3056 = vst [vmem:[%s208 + $0xd8] sm:$0xff] %v3024
      %3057 = vst [vmem:[%s208 + $0xe0] sm:$0xff] %v3025
      %3058 = vst [vmem:[%s208 + $0xe8] sm:$0xff] %v3026
      %3059 = vst [vmem:[%s208 + $0xf0] sm:$0xff] %v3027
      %3060 = vst [vmem:[%s208 + $0xf8] sm:$0xff] %v3028
      %s3061 = smul.u32 16, %s19
      %p3062 = scmp.lt.s32.totalorder %s18, 1
      %s3063 = scalar_select %p3062, %s18, 1
      %p3064 = scmp.lt.s32.totalorder %s3061, 15
      %s3065 = scalar_select %p3064, %s3061, 15
      %s3066 = smul.addr %s3065, 2
      %s3067 = smul.addr %s3063, 32
      %s3068 = sadd.s32 %s3066, %s3067
      %s3069 = smul.addr %s3068, 8
      %s3070 = scalar_lea.vmem %s3, %s3069
      // Predicated region
      $region33: #{conv2d_batchnorm_relu.1} parent=31 // pred_check
        %p3071 = pneg %p116
      $region34: #{conv2d_batchnorm_relu.1} parent=31 // pred_check_branch
        %3073 = sbr.rel (%p3071) target = $region36
      $region35: #{conv2d_batchnorm_relu.1} parent=31 // pred_region
        %s3074 = smul.u32 16, %s19
      $region36: #{conv2d_batchnorm_relu.1} parent=31 // pred_fallthru
        _
    $region32: #{conv2d_batchnorm_relu.1} parent=5 // pred_fallthru
      _
    %p3075 = scmp.le.s32.totalorder 2, %s9
    // Predicated region
    $region37: #{conv2d_batchnorm_relu.1} parent=5 // pred_check
      %p3076 = pneg %p3075
    $region38: #{conv2d_batchnorm_relu.1} parent=5 // pred_check_branch
      %3078 = sbr.rel (%p3076) target = $region40
    $region39: #{conv2d_batchnorm_relu.1} parent=5 // pred_region
      %s3079 = ssub.s32 %s9, 2
      // Predicated region
      $region41: #{conv2d_batchnorm_relu.1} parent=39 // pred_check
        %p3080 = pneg %p122
      $region42: #{conv2d_batchnorm_relu.1} parent=39 // pred_check_branch
        %3082 = sbr.rel (%p3080) target = $region44
      $region43: #{conv2d_batchnorm_relu.1} parent=39 // pred_region
        %s3083 = smul.u32 16, %s21
        %p3084 = scmp.lt.s32.totalorder %s20, 1
        %s3085 = scalar_select %p3084, %s20, 1
        %p3086 = scmp.lt.s32.totalorder %s3083, 15
        %s3087 = scalar_select %p3086, %s3083, 15
        %s3088 = smul.addr %s3087, 2
        %s3089 = smul.addr %s3085, 32
        %s3090 = sadd.s32 %s3088, %s3089
        %s3091 = smul.addr %s3090, 8
        %s3092 = scalar_lea.vmem %s3, %s3091
      $region44: #{conv2d_batchnorm_relu.1} parent=39 // pred_fallthru
        _
    $region40: #{conv2d_batchnorm_relu.1} parent=5 // pred_fallthru
      _
  $region6: #{conv2d_batchnorm_relu.1} parent=0 // loop_footer
    %s13 = sadd.s32 1, %s9
  $region7: #{conv2d_batchnorm_relu.1} parent=0 // loop_footer_branch
    %8 = sbr.rel target = $region3
  $region8: #{conv2d_batchnorm_relu.1} parent=0 // loop_exit
    _

</llo_original>
